<compile_context>
chip_gen: v5e
topology: v5e:2x2
jax: 0.10.0
libtpu: 0.0.40
codegen_flags: <defaults>
</compile_context>

<pallas_src>
import math

import jax
import jax.numpy as jnp
from jax.experimental import pallas as pl
from jax.experimental.pallas import tpu as pltpu  # noqa: F401  (TPU backend assumed)

# ---------------- tiny-BERT config ----------------
B, S, H = 2, 8, 32          # batch, seq len, hidden size
NH, HD = 2, 16              # num heads, head dim (NH * HD == H)
FF = 64                     # FFN intermediate size
L = 2                       # number of encoder layers
VOCAB, MAX_POS = 100, 16
NUM_CLASSES = 3
EPS = 1e-12
SCALE = 1.0 / math.sqrt(HD)

VW = 128                    # packed-vector / weight-slab lane width (lane-dense)
NVEC = 2 + 3 * L            # parameter rows in the packed vector array (mask rows appended at runtime)
OUT_W = 128                 # lane-dense output slab width


def _layernorm(x, gamma, beta):
    mu = jnp.mean(x, axis=-1, keepdims=True)
    var = jnp.mean(jnp.square(x - mu), axis=-1, keepdims=True)
    return (x - mu) * jax.lax.rsqrt(var + EPS) * gamma + beta


# ---------------- the single fused kernel ----------------
def text_bert_kernel(emb_ref, attn_ref, ffn_ref, vec_ref, out_ref):
    vec = vec_ref[...]                                            # (NVEC + B, 128) f32

    # additive HF-style attention-mask bias rows (precomputed in the wrapper)
    mask_bias = vec[NVEC:NVEC + B, 0:S]                           # (B, S) f32

    # embedding LayerNorm
    x = _layernorm(emb_ref[...], vec[0:1, 0:H], vec[0:1, H:2 * H])    # (B, S, H) f32

    for l in range(L):                                            # static layer loop (L=2)
        aw = attn_ref[l]                                          # (H, 128) bf16: Wq*s|Wk|Wv|Wo
        fw = ffn_ref[l]                                           # (FF, 128) bf16: W1|W2|head

        r = 1 + 3 * l
        bqkv = vec[r:r + 1, 0:3 * H]                              # bq*s | bk | bv
        bo = vec[r:r + 1, 3 * H:4 * H]
        g1 = vec[r + 1:r + 2, 0:H]
        be1 = vec[r + 1:r + 2, H:2 * H]
        b1 = vec[r + 1:r + 2, 2 * H:2 * H + FF]
        b2 = vec[r + 2:r + 3, 0:H]
        g2 = vec[r + 2:r + 3, H:2 * H]
        be2 = vec[r + 2:r + 3, 2 * H:3 * H]

        # fused QKV projection: one (B*S,H) x (H,3H) matmul (1/sqrt(HD) folded into Wq)
        x2 = x.reshape(B * S, H)
        qkv = jnp.dot(x2.astype(jnp.bfloat16), aw[:, 0:3 * H],
                      preferred_element_type=jnp.float32) + bqkv  # (B*S, 3H) f32

        # multi-head attention: heads sliced straight from the 2-D qkv (static lane offsets),
        # contexts lane-concatenated, single Wo matmul.
        ctx_heads = []
        for h in range(NH):
            qh = qkv[:, h * HD:(h + 1) * HD].reshape(B, S, HD).astype(jnp.bfloat16)
            kh = qkv[:, H + h * HD:H + (h + 1) * HD].reshape(B, S, HD).astype(jnp.bfloat16)
            vh = qkv[:, 2 * H + h * HD:2 * H + (h + 1) * HD].reshape(B, S, HD).astype(jnp.bfloat16)
            s = jnp.einsum('bqd,bkd->bqk', qh, kh,
                           preferred_element_type=jnp.float32)    # (B, S, S) f32
            s = s + mask_bias[:, None, :]
            # no max-subtraction: scores bounded (tiny weight scale), exp(-1e4) underflows to 0.
            p = jnp.exp(s)
            p = p * pl.reciprocal(jnp.sum(p, axis=-1, keepdims=True), approx=True)
            ctx_heads.append(
                jnp.einsum('bqk,bkd->bqd', p.astype(jnp.bfloat16), vh,
                           preferred_element_type=jnp.float32).reshape(B * S, HD))
        ctx = jnp.concatenate(ctx_heads, axis=-1)                 # (B*S, H)

        attn = jnp.dot(ctx.astype(jnp.bfloat16), aw[:, 3 * H:4 * H],
                       preferred_element_type=jnp.float32) + bo
        x = _layernorm(x + attn.reshape(B, S, H), g1, be1)

        # FFN
        h1 = jnp.dot(x.reshape(B * S, H).astype(jnp.bfloat16), fw[0:H, 0:FF],
                     preferred_element_type=jnp.float32) + b1
        # TODO(synk): HF BERT uses exact erf-GELU; tanh approximation used here.
        h1 = jax.nn.gelu(h1, approximate=True)
        h2 = jnp.dot(h1.astype(jnp.bfloat16), fw[:, FF:FF + H],
                     preferred_element_type=jnp.float32) + b2
        x = _layernorm(x + h2.reshape(B, S, H), g2, be2)

    # head: [CLS] hidden state, pooler (tanh), dropout (identity at inference), classifier
    cls = x[:, 0, :]                                              # (B, H)
    hr = 1 + 3 * L
    bp = vec[hr:hr + 1, 0:H]
    bc = vec[hr:hr + 1, H:2 * H]                                  # padded to H lanes
    fw_last = ffn_ref[L - 1]
    wp = fw_last[0:H, FF + H:FF + 2 * H]                          # (H, H) bf16
    wc = fw_last[H:2 * H, FF + H:FF + 2 * H]                      # (H, H) bf16, cols>=3 zero
    pooled = jnp.tanh(jnp.dot(cls.astype(jnp.bfloat16), wp,
                              preferred_element_type=jnp.float32) + bp)
    logits_pad = jnp.dot(pooled.astype(jnp.bfloat16), wc,
                         preferred_element_type=jnp.float32) + bc  # (B, H), cols>=3 are 0

    # single lane-dense output slab: [logits_pad | cls | pooled | zeros]
    out_ref[...] = jnp.concatenate(
        [logits_pad, cls, pooled, jnp.zeros((B, OUT_W - 3 * H), jnp.float32)], axis=-1)


# ---------------- parameters (deterministic synthetic) ----------------
def init_params(key):
    def nrm(k, shape, scale=0.02):
        return jax.random.normal(k, shape, jnp.float32) * scale

    keys = iter(jax.random.split(key, 3 + 6 * L + 2))

    word_emb = nrm(next(keys), (VOCAB, H))
    pos_emb = nrm(next(keys), (MAX_POS, H))
    type_emb = nrm(next(keys), (2, H))
    pos_type_emb = pos_emb[:S] + type_emb[0][None, :]             # token_type_id == 0 pre-folded

    zH, oH = jnp.zeros((H,), jnp.float32), jnp.ones((H,), jnp.float32)
    zFF = jnp.zeros((FF,), jnp.float32)

    def row(*parts):
        r = jnp.concatenate(parts)
        return jnp.pad(r, (0, VW - r.shape[0]))

    attn_w, ffn_w, vec_rows = [], [], []
    vec_rows.append(row(oH, zH))                                  # emb LN gamma | beta
    for _ in range(L):
        wq = nrm(next(keys), (H, H))
        wk = nrm(next(keys), (H, H))
        wv = nrm(next(keys), (H, H))
        wo = nrm(next(keys), (H, H))
        w1 = nrm(next(keys), (H, FF))
        w2 = nrm(next(keys), (FF, H))
        # lane-dense attention slab: [Wq*SCALE | Wk | Wv | Wo]  -> (H, 128)
        attn_w.append(jnp.concatenate([wq * SCALE, wk, wv, wo], axis=1))
        # FFN slab (FF, 128): lanes 0:64 rows 0:32 = W1, lanes 64:96 = W2
        slab = jnp.zeros((FF, VW), jnp.float32)
        slab = slab.at[0:H, 0:FF].set(w1)
        slab = slab.at[:, FF:FF + H].set(w2)
        ffn_w.append(slab)
        vec_rows.append(row(zH * SCALE, zH, zH, zH))              # bq*SCALE | bk | bv | bo
        vec_rows.append(row(oH, zH, zFF))                         # ln1_g | ln1_b | b1
        vec_rows.append(row(zH, oH, zH))                          # b2 | ln2_g | ln2_b

    wp = nrm(next(keys), (H, H))
    wc = nrm(next(keys), (H, NUM_CLASSES))
    wc_pad = jnp.zeros((H, H), jnp.float32).at[:, :NUM_CLASSES].set(wc)
    # pooler / classifier weights packed into the spare lanes of the last layer's FFN slab
    ffn_w[L - 1] = (ffn_w[L - 1]
                    .at[0:H, FF + H:FF + 2 * H].set(wp)
                    .at[H:2 * H, FF + H:FF + 2 * H].set(wc_pad))
    vec_rows.append(row(zH, zH))                                  # bp | bc(pad)

    return {
        'word_emb': word_emb,                                     # (VOCAB, H) f32
        'pos_type_emb': pos_type_emb,                             # (S, H) f32
        'attn_w': jnp.stack(attn_w).astype(jnp.bfloat16),         # (L, H, 128)
        'ffn_w': jnp.stack(ffn_w).astype(jnp.bfloat16),           # (L, FF, 128)
        'vec': jnp.stack(vec_rows).astype(jnp.float32),           # (NVEC, 128)
    }


# ---------------- forward ----------------
@jax.jit
def text_bert_forward(params, input_ids, attention_mask):
    # TODO(synk): token-id embedding gather stays as plain-JAX glue (XLA gather);
    # everything else runs inside the single fused kernel.
    emb = params['word_emb'][input_ids] + params['pos_type_emb'][None, :, :]   # (B, S, H)

    # additive mask bias precomputed here and packed as extra rows of `vec`
    mask_rows = jnp.pad((1.0 - attention_mask.astype(jnp.float32)) * -10000.0,
                        ((0, 0), (0, VW - S)))                                  # (B, 128)
    vec_rt = jnp.concatenate([params['vec'], mask_rows], axis=0)                # (NVEC+B, 128)

    slab = pl.pallas_call(
        text_bert_kernel,
        out_shape=jax.ShapeDtypeStruct((B, OUT_W), jnp.float32),
    )(emb, params['attn_w'], params['ffn_w'], vec_rt)

    return {'logits': slab[:, :NUM_CLASSES],
            'cls_repr': slab[:, H:2 * H],
            'pooler_repr': slab[:, 2 * H:3 * H]}


if __name__ == "__main__":
    key = jax.random.PRNGKey(0)
    k_param, k_ids = jax.random.split(key)
    params = init_params(k_param)

    input_ids = jax.random.randint(k_ids, (B, S), 0, VOCAB, dtype=jnp.int32)
    attention_mask = jnp.array([[1, 1, 1, 1, 1, 1, 1, 1],
                                [1, 1, 1, 1, 1, 0, 0, 0]], dtype=jnp.int32)

    out = text_bert_forward(params, input_ids, attention_mask)
    jax.block_until_ready(out)

    assert out['logits'].shape == (B, NUM_CLASSES)
    assert out['cls_repr'].shape == (B, H)
    assert out['pooler_repr'].shape == (B, H)
    print("KERNEL_OK")
</pallas_src>

<mosaic_0001>
module attributes {stable_mosaic.version = 11 : i64} {
  func.func @text_bert_kernel(%arg0: memref<2x8x32xf32, #tpu.memory_space<vmem>>, %arg1: memref<2x32x128xbf16, #tpu.memory_space<vmem>>, %arg2: memref<2x64x128xbf16, #tpu.memory_space<vmem>>, %arg3: memref<10x128xf32, #tpu.memory_space<vmem>>, %arg4: memref<2x128xf32, #tpu.memory_space<vmem>>) attributes {dimension_semantics = [], scalar_prefetch = 0 : i64, scratch_operands = 0 : i64, tpu.core_type = #tpu.core_type<tc>} {
    %c0 = arith.constant 0 : index
    %c0_0 = arith.constant 0 : index
    %0 = vector.load %arg3[%c0, %c0_0] : memref<10x128xf32, #tpu.memory_space<vmem>>, vector<10x128xf32>
    %1 = vector.extract_strided_slice %0 {offsets = [8, 0], sizes = [2, 8], strides = [1, 1]} : vector<10x128xf32> to vector<2x8xf32>
    %c0_1 = arith.constant 0 : index
    %c0_2 = arith.constant 0 : index
    %c0_3 = arith.constant 0 : index
    %2 = vector.load %arg0[%c0_1, %c0_2, %c0_3] : memref<2x8x32xf32, #tpu.memory_space<vmem>>, vector<2x8x32xf32>
    %3 = vector.extract_strided_slice %0 {offsets = [0, 0], sizes = [1, 32], strides = [1, 1]} : vector<10x128xf32> to vector<1x32xf32>
    %4 = vector.extract_strided_slice %0 {offsets = [0, 32], sizes = [1, 32], strides = [1, 1]} : vector<10x128xf32> to vector<1x32xf32>
    %cst = arith.constant dense<0.000000e+00> : vector<2x8xf32>
    %5 = vector.multi_reduction <add>, %2, %cst [2] : vector<2x8x32xf32> to vector<2x8xf32>
    %6 = vector.shape_cast %5 : vector<2x8xf32> to vector<2x8x1xf32>
    %cst_4 = arith.constant 3.200000e+01 : f32
    %7 = vector.broadcast %cst_4 : f32 to vector<2x8x1xf32>
    %8 = arith.divf %6, %7 : vector<2x8x1xf32>
    %9 = vector.broadcast %8 : vector<2x8x1xf32> to vector<2x8x32xf32>
    %10 = arith.subf %2, %9 : vector<2x8x32xf32>
    %11 = arith.mulf %10, %10 : vector<2x8x32xf32>
    %cst_5 = arith.constant dense<0.000000e+00> : vector<2x8xf32>
    %12 = vector.multi_reduction <add>, %11, %cst_5 [2] : vector<2x8x32xf32> to vector<2x8xf32>
    %13 = vector.shape_cast %12 : vector<2x8xf32> to vector<2x8x1xf32>
    %cst_6 = arith.constant 3.200000e+01 : f32
    %14 = vector.broadcast %cst_6 : f32 to vector<2x8x1xf32>
    %15 = arith.divf %13, %14 : vector<2x8x1xf32>
    %16 = vector.broadcast %8 : vector<2x8x1xf32> to vector<2x8x32xf32>
    %17 = arith.subf %2, %16 : vector<2x8x32xf32>
    %cst_7 = arith.constant 9.99999996E-13 : f32
    %18 = vector.broadcast %cst_7 : f32 to vector<2x8x1xf32>
    %19 = arith.addf %15, %18 : vector<2x8x1xf32>
    %20 = math.rsqrt %19 : vector<2x8x1xf32>
    %21 = vector.broadcast %20 : vector<2x8x1xf32> to vector<2x8x32xf32>
    %22 = arith.mulf %17, %21 : vector<2x8x32xf32>
    %23 = vector.shape_cast %3 : vector<1x32xf32> to vector<1x1x32xf32>
    %24 = vector.broadcast %23 : vector<1x1x32xf32> to vector<2x8x32xf32>
    %25 = arith.mulf %22, %24 : vector<2x8x32xf32>
    %26 = vector.shape_cast %4 : vector<1x32xf32> to vector<1x1x32xf32>
    %27 = vector.broadcast %26 : vector<1x1x32xf32> to vector<2x8x32xf32>
    %28 = arith.addf %25, %27 : vector<2x8x32xf32>
    %c0_8 = arith.constant 0 : index
    %c0_9 = arith.constant 0 : index
    %c0_10 = arith.constant 0 : index
    %29 = vector.load %arg1[%c0_8, %c0_9, %c0_10] : memref<2x32x128xbf16, #tpu.memory_space<vmem>>, vector<1x32x128xbf16>
    %30 = vector.shape_cast %29 : vector<1x32x128xbf16> to vector<32x128xbf16>
    %c0_11 = arith.constant 0 : index
    %c0_12 = arith.constant 0 : index
    %c0_13 = arith.constant 0 : index
    %31 = vector.load %arg2[%c0_11, %c0_12, %c0_13] : memref<2x64x128xbf16, #tpu.memory_space<vmem>>, vector<1x64x128xbf16>
    %32 = vector.shape_cast %31 : vector<1x64x128xbf16> to vector<64x128xbf16>
    %33 = vector.extract_strided_slice %0 {offsets = [1, 0], sizes = [1, 96], strides = [1, 1]} : vector<10x128xf32> to vector<1x96xf32>
    %34 = vector.extract_strided_slice %0 {offsets = [1, 96], sizes = [1, 32], strides = [1, 1]} : vector<10x128xf32> to vector<1x32xf32>
    %35 = vector.extract_strided_slice %0 {offsets = [2, 0], sizes = [1, 32], strides = [1, 1]} : vector<10x128xf32> to vector<1x32xf32>
    %36 = vector.extract_strided_slice %0 {offsets = [2, 32], sizes = [1, 32], strides = [1, 1]} : vector<10x128xf32> to vector<1x32xf32>
    %37 = vector.extract_strided_slice %0 {offsets = [2, 64], sizes = [1, 64], strides = [1, 1]} : vector<10x128xf32> to vector<1x64xf32>
    %38 = vector.extract_strided_slice %0 {offsets = [3, 0], sizes = [1, 32], strides = [1, 1]} : vector<10x128xf32> to vector<1x32xf32>
    %39 = vector.extract_strided_slice %0 {offsets = [3, 32], sizes = [1, 32], strides = [1, 1]} : vector<10x128xf32> to vector<1x32xf32>
    %40 = vector.extract_strided_slice %0 {offsets = [3, 64], sizes = [1, 32], strides = [1, 1]} : vector<10x128xf32> to vector<1x32xf32>
    %41 = vector.shape_cast %28 : vector<2x8x32xf32> to vector<16x32xf32>
    %42 = arith.truncf %41 : vector<16x32xf32> to vector<16x32xbf16>
    %43 = vector.extract_strided_slice %30 {offsets = [0, 0], sizes = [32, 96], strides = [1, 1]} : vector<32x128xbf16> to vector<32x96xbf16>
    %cst_14 = arith.constant dense<0.000000e+00> : vector<16x96xf32>
    %44 = tpu.matmul %42, %43, %cst_14 {dimension_numbers = #tpu.dot_dimension_numbers<[1], [0], [0], [1], [0, 0, 1, 1], [], []>} : vector<16x32xbf16>, vector<32x96xbf16>, vector<16x96xf32> -> vector<16x96xf32>
    %45 = vector.broadcast %33 : vector<1x96xf32> to vector<16x96xf32>
    %46 = arith.addf %44, %45 : vector<16x96xf32>
    %47 = vector.extract_strided_slice %46 {offsets = [0, 0], sizes = [16, 16], strides = [1, 1]} : vector<16x96xf32> to vector<16x16xf32>
    %48 = vector.shape_cast %47 : vector<16x16xf32> to vector<2x8x16xf32>
    %49 = arith.truncf %48 : vector<2x8x16xf32> to vector<2x8x16xbf16>
    %50 = vector.extract_strided_slice %46 {offsets = [0, 32], sizes = [16, 16], strides = [1, 1]} : vector<16x96xf32> to vector<16x16xf32>
    %51 = vector.shape_cast %50 : vector<16x16xf32> to vector<2x8x16xf32>
    %52 = arith.truncf %51 : vector<2x8x16xf32> to vector<2x8x16xbf16>
    %53 = vector.extract_strided_slice %46 {offsets = [0, 64], sizes = [16, 16], strides = [1, 1]} : vector<16x96xf32> to vector<16x16xf32>
    %54 = vector.shape_cast %53 : vector<16x16xf32> to vector<2x8x16xf32>
    %55 = arith.truncf %54 : vector<2x8x16xf32> to vector<2x8x16xbf16>
    "tpu.trace_start"() <{level = 10 : i32, message = "bqd,bkd->bqk"}> : () -> ()
    %cst_15 = arith.constant dense<0.000000e+00> : vector<2x8x8xf32>
    %56 = tpu.matmul %49, %52, %cst_15 {dimension_numbers = #tpu.dot_dimension_numbers<[2], [2], [1], [1], [0, 0, 0, 1, 1, 1], [0], [0]>} : vector<2x8x16xbf16>, vector<2x8x16xbf16>, vector<2x8x8xf32> -> vector<2x8x8xf32>
    "tpu.trace_stop"() : () -> ()
    %57 = vector.shape_cast %1 : vector<2x8xf32> to vector<2x1x8xf32>
    %58 = vector.broadcast %57 : vector<2x1x8xf32> to vector<2x8x8xf32>
    %59 = arith.addf %56, %58 : vector<2x8x8xf32>
    %60 = math.exp %59 : vector<2x8x8xf32>
    %cst_16 = arith.constant dense<0.000000e+00> : vector<2x8xf32>
    %61 = vector.multi_reduction <add>, %60, %cst_16 [2] : vector<2x8x8xf32> to vector<2x8xf32>
    %62 = vector.shape_cast %61 : vector<2x8xf32> to vector<2x8x1xf32>
    %63 = tpu.reciprocal %62 {approx = true} : vector<2x8x1xf32> -> vector<2x8x1xf32>
    %64 = vector.broadcast %63 : vector<2x8x1xf32> to vector<2x8x8xf32>
    %65 = arith.mulf %60, %64 : vector<2x8x8xf32>
    %66 = arith.truncf %65 : vector<2x8x8xf32> to vector<2x8x8xbf16>
    "tpu.trace_start"() <{level = 10 : i32, message = "bqk,bkd->bqd"}> : () -> ()
    %cst_17 = arith.constant dense<0.000000e+00> : vector<2x8x16xf32>
    %67 = tpu.matmul %66, %55, %cst_17 {dimension_numbers = #tpu.dot_dimension_numbers<[2], [1], [1], [2], [0, 0, 0, 1, 1, 2], [0], [0]>} : vector<2x8x8xbf16>, vector<2x8x16xbf16>, vector<2x8x16xf32> -> vector<2x8x16xf32>
    "tpu.trace_stop"() : () -> ()
    %68 = vector.shape_cast %67 : vector<2x8x16xf32> to vector<16x16xf32>
    %69 = vector.extract_strided_slice %46 {offsets = [0, 16], sizes = [16, 16], strides = [1, 1]} : vector<16x96xf32> to vector<16x16xf32>
    %70 = vector.shape_cast %69 : vector<16x16xf32> to vector<2x8x16xf32>
    %71 = arith.truncf %70 : vector<2x8x16xf32> to vector<2x8x16xbf16>
    %72 = vector.extract_strided_slice %46 {offsets = [0, 48], sizes = [16, 16], strides = [1, 1]} : vector<16x96xf32> to vector<16x16xf32>
    %73 = vector.shape_cast %72 : vector<16x16xf32> to vector<2x8x16xf32>
    %74 = arith.truncf %73 : vector<2x8x16xf32> to vector<2x8x16xbf16>
    %75 = vector.extract_strided_slice %46 {offsets = [0, 80], sizes = [16, 16], strides = [1, 1]} : vector<16x96xf32> to vector<16x16xf32>
    %76 = vector.shape_cast %75 : vector<16x16xf32> to vector<2x8x16xf32>
    %77 = arith.truncf %76 : vector<2x8x16xf32> to vector<2x8x16xbf16>
    "tpu.trace_start"() <{level = 10 : i32, message = "bqd,bkd->bqk"}> : () -> ()
    %cst_18 = arith.constant dense<0.000000e+00> : vector<2x8x8xf32>
    %78 = tpu.matmul %71, %74, %cst_18 {dimension_numbers = #tpu.dot_dimension_numbers<[2], [2], [1], [1], [0, 0, 0, 1, 1, 1], [0], [0]>} : vector<2x8x16xbf16>, vector<2x8x16xbf16>, vector<2x8x8xf32> -> vector<2x8x8xf32>
    "tpu.trace_stop"() : () -> ()
    %79 = vector.shape_cast %1 : vector<2x8xf32> to vector<2x1x8xf32>
    %80 = vector.broadcast %79 : vector<2x1x8xf32> to vector<2x8x8xf32>
    %81 = arith.addf %78, %80 : vector<2x8x8xf32>
    %82 = math.exp %81 : vector<2x8x8xf32>
    %cst_19 = arith.constant dense<0.000000e+00> : vector<2x8xf32>
    %83 = vector.multi_reduction <add>, %82, %cst_19 [2] : vector<2x8x8xf32> to vector<2x8xf32>
    %84 = vector.shape_cast %83 : vector<2x8xf32> to vector<2x8x1xf32>
    %85 = tpu.reciprocal %84 {approx = true} : vector<2x8x1xf32> -> vector<2x8x1xf32>
    %86 = vector.broadcast %85 : vector<2x8x1xf32> to vector<2x8x8xf32>
    %87 = arith.mulf %82, %86 : vector<2x8x8xf32>
    %88 = arith.truncf %87 : vector<2x8x8xf32> to vector<2x8x8xbf16>
    "tpu.trace_start"() <{level = 10 : i32, message = "bqk,bkd->bqd"}> : () -> ()
    %cst_20 = arith.constant dense<0.000000e+00> : vector<2x8x16xf32>
    %89 = tpu.matmul %88, %77, %cst_20 {dimension_numbers = #tpu.dot_dimension_numbers<[2], [1], [1], [2], [0, 0, 0, 1, 1, 2], [0], [0]>} : vector<2x8x8xbf16>, vector<2x8x16xbf16>, vector<2x8x16xf32> -> vector<2x8x16xf32>
    "tpu.trace_stop"() : () -> ()
    %90 = vector.shape_cast %89 : vector<2x8x16xf32> to vector<16x16xf32>
    %91 = tpu.concatenate %68, %90 in 1 : vector<16x16xf32>, vector<16x16xf32> -> vector<16x32xf32>
    %92 = arith.truncf %91 : vector<16x32xf32> to vector<16x32xbf16>
    %93 = vector.extract_strided_slice %30 {offsets = [0, 96], sizes = [32, 32], strides = [1, 1]} : vector<32x128xbf16> to vector<32x32xbf16>
    %cst_21 = arith.constant dense<0.000000e+00> : vector<16x32xf32>
    %94 = tpu.matmul %92, %93, %cst_21 {dimension_numbers = #tpu.dot_dimension_numbers<[1], [0], [0], [1], [0, 0, 1, 1], [], []>} : vector<16x32xbf16>, vector<32x32xbf16>, vector<16x32xf32> -> vector<16x32xf32>
    %95 = vector.broadcast %34 : vector<1x32xf32> to vector<16x32xf32>
    %96 = arith.addf %94, %95 : vector<16x32xf32>
    %97 = vector.shape_cast %96 : vector<16x32xf32> to vector<2x8x32xf32>
    %98 = arith.addf %28, %97 : vector<2x8x32xf32>
    %cst_22 = arith.constant dense<0.000000e+00> : vector<2x8xf32>
    %99 = vector.multi_reduction <add>, %98, %cst_22 [2] : vector<2x8x32xf32> to vector<2x8xf32>
    %100 = vector.shape_cast %99 : vector<2x8xf32> to vector<2x8x1xf32>
    %cst_23 = arith.constant 3.200000e+01 : f32
    %101 = vector.broadcast %cst_23 : f32 to vector<2x8x1xf32>
    %102 = arith.divf %100, %101 : vector<2x8x1xf32>
    %103 = vector.broadcast %102 : vector<2x8x1xf32> to vector<2x8x32xf32>
    %104 = arith.subf %98, %103 : vector<2x8x32xf32>
    %105 = arith.mulf %104, %104 : vector<2x8x32xf32>
    %cst_24 = arith.constant dense<0.000000e+00> : vector<2x8xf32>
    %106 = vector.multi_reduction <add>, %105, %cst_24 [2] : vector<2x8x32xf32> to vector<2x8xf32>
    %107 = vector.shape_cast %106 : vector<2x8xf32> to vector<2x8x1xf32>
    %cst_25 = arith.constant 3.200000e+01 : f32
    %108 = vector.broadcast %cst_25 : f32 to vector<2x8x1xf32>
    %109 = arith.divf %107, %108 : vector<2x8x1xf32>
    %110 = vector.broadcast %102 : vector<2x8x1xf32> to vector<2x8x32xf32>
    %111 = arith.subf %98, %110 : vector<2x8x32xf32>
    %cst_26 = arith.constant 9.99999996E-13 : f32
    %112 = vector.broadcast %cst_26 : f32 to vector<2x8x1xf32>
    %113 = arith.addf %109, %112 : vector<2x8x1xf32>
    %114 = math.rsqrt %113 : vector<2x8x1xf32>
    %115 = vector.broadcast %114 : vector<2x8x1xf32> to vector<2x8x32xf32>
    %116 = arith.mulf %111, %115 : vector<2x8x32xf32>
    %117 = vector.shape_cast %35 : vector<1x32xf32> to vector<1x1x32xf32>
    %118 = vector.broadcast %117 : vector<1x1x32xf32> to vector<2x8x32xf32>
    %119 = arith.mulf %116, %118 : vector<2x8x32xf32>
    %120 = vector.shape_cast %36 : vector<1x32xf32> to vector<1x1x32xf32>
    %121 = vector.broadcast %120 : vector<1x1x32xf32> to vector<2x8x32xf32>
    %122 = arith.addf %119, %121 : vector<2x8x32xf32>
    %123 = vector.shape_cast %122 : vector<2x8x32xf32> to vector<16x32xf32>
    %124 = arith.truncf %123 : vector<16x32xf32> to vector<16x32xbf16>
    %125 = vector.extract_strided_slice %32 {offsets = [0, 0], sizes = [32, 64], strides = [1, 1]} : vector<64x128xbf16> to vector<32x64xbf16>
    %cst_27 = arith.constant dense<0.000000e+00> : vector<16x64xf32>
    %126 = tpu.matmul %124, %125, %cst_27 {dimension_numbers = #tpu.dot_dimension_numbers<[1], [0], [0], [1], [0, 0, 1, 1], [], []>} : vector<16x32xbf16>, vector<32x64xbf16>, vector<16x64xf32> -> vector<16x64xf32>
    %127 = vector.broadcast %37 : vector<1x64xf32> to vector<16x64xf32>
    %128 = arith.addf %126, %127 : vector<16x64xf32>
    %129 = arith.mulf %128, %128 : vector<16x64xf32>
    %130 = arith.mulf %128, %129 : vector<16x64xf32>
    %cst_28 = arith.constant 4.471500e-02 : f32
    %131 = vector.broadcast %cst_28 : f32 to vector<16x64xf32>
    %132 = arith.mulf %131, %130 : vector<16x64xf32>
    %133 = arith.addf %128, %132 : vector<16x64xf32>
    %cst_29 = arith.constant 0.797884583 : f32
    %134 = vector.broadcast %cst_29 : f32 to vector<16x64xf32>
    %135 = arith.mulf %134, %133 : vector<16x64xf32>
    %136 = math.tanh %135 : vector<16x64xf32>
    %cst_30 = arith.constant 1.000000e+00 : f32
    %137 = vector.broadcast %cst_30 : f32 to vector<16x64xf32>
    %138 = arith.addf %137, %136 : vector<16x64xf32>
    %cst_31 = arith.constant 5.000000e-01 : f32
    %139 = vector.broadcast %cst_31 : f32 to vector<16x64xf32>
    %140 = arith.mulf %139, %138 : vector<16x64xf32>
    %141 = arith.mulf %128, %140 : vector<16x64xf32>
    %142 = arith.truncf %141 : vector<16x64xf32> to vector<16x64xbf16>
    %143 = vector.extract_strided_slice %32 {offsets = [0, 64], sizes = [64, 32], strides = [1, 1]} : vector<64x128xbf16> to vector<64x32xbf16>
    %cst_32 = arith.constant dense<0.000000e+00> : vector<16x32xf32>
    %144 = tpu.matmul %142, %143, %cst_32 {dimension_numbers = #tpu.dot_dimension_numbers<[1], [0], [0], [1], [0, 0, 1, 1], [], []>} : vector<16x64xbf16>, vector<64x32xbf16>, vector<16x32xf32> -> vector<16x32xf32>
    %145 = vector.broadcast %38 : vector<1x32xf32> to vector<16x32xf32>
    %146 = arith.addf %144, %145 : vector<16x32xf32>
    %147 = vector.shape_cast %146 : vector<16x32xf32> to vector<2x8x32xf32>
    %148 = arith.addf %122, %147 : vector<2x8x32xf32>
    %cst_33 = arith.constant dense<0.000000e+00> : vector<2x8xf32>
    %149 = vector.multi_reduction <add>, %148, %cst_33 [2] : vector<2x8x32xf32> to vector<2x8xf32>
    %150 = vector.shape_cast %149 : vector<2x8xf32> to vector<2x8x1xf32>
    %cst_34 = arith.constant 3.200000e+01 : f32
    %151 = vector.broadcast %cst_34 : f32 to vector<2x8x1xf32>
    %152 = arith.divf %150, %151 : vector<2x8x1xf32>
    %153 = vector.broadcast %152 : vector<2x8x1xf32> to vector<2x8x32xf32>
    %154 = arith.subf %148, %153 : vector<2x8x32xf32>
    %155 = arith.mulf %154, %154 : vector<2x8x32xf32>
    %cst_35 = arith.constant dense<0.000000e+00> : vector<2x8xf32>
    %156 = vector.multi_reduction <add>, %155, %cst_35 [2] : vector<2x8x32xf32> to vector<2x8xf32>
    %157 = vector.shape_cast %156 : vector<2x8xf32> to vector<2x8x1xf32>
    %cst_36 = arith.constant 3.200000e+01 : f32
    %158 = vector.broadcast %cst_36 : f32 to vector<2x8x1xf32>
    %159 = arith.divf %157, %158 : vector<2x8x1xf32>
    %160 = vector.broadcast %152 : vector<2x8x1xf32> to vector<2x8x32xf32>
    %161 = arith.subf %148, %160 : vector<2x8x32xf32>
    %cst_37 = arith.constant 9.99999996E-13 : f32
    %162 = vector.broadcast %cst_37 : f32 to vector<2x8x1xf32>
    %163 = arith.addf %159, %162 : vector<2x8x1xf32>
    %164 = math.rsqrt %163 : vector<2x8x1xf32>
    %165 = vector.broadcast %164 : vector<2x8x1xf32> to vector<2x8x32xf32>
    %166 = arith.mulf %161, %165 : vector<2x8x32xf32>
    %167 = vector.shape_cast %39 : vector<1x32xf32> to vector<1x1x32xf32>
    %168 = vector.broadcast %167 : vector<1x1x32xf32> to vector<2x8x32xf32>
    %169 = arith.mulf %166, %168 : vector<2x8x32xf32>
    %170 = vector.shape_cast %40 : vector<1x32xf32> to vector<1x1x32xf32>
    %171 = vector.broadcast %170 : vector<1x1x32xf32> to vector<2x8x32xf32>
    %172 = arith.addf %169, %171 : vector<2x8x32xf32>
    %c1 = arith.constant 1 : index
    %c0_38 = arith.constant 0 : index
    %c0_39 = arith.constant 0 : index
    %173 = vector.load %arg1[%c1, %c0_38, %c0_39] : memref<2x32x128xbf16, #tpu.memory_space<vmem>>, vector<1x32x128xbf16>
    %174 = vector.shape_cast %173 : vector<1x32x128xbf16> to vector<32x128xbf16>
    %c1_40 = arith.constant 1 : index
    %c0_41 = arith.constant 0 : index
    %c0_42 = arith.constant 0 : index
    %175 = vector.load %arg2[%c1_40, %c0_41, %c0_42] : memref<2x64x128xbf16, #tpu.memory_space<vmem>>, vector<1x64x128xbf16>
    %176 = vector.shape_cast %175 : vector<1x64x128xbf16> to vector<64x128xbf16>
    %177 = vector.extract_strided_slice %0 {offsets = [4, 0], sizes = [1, 96], strides = [1, 1]} : vector<10x128xf32> to vector<1x96xf32>
    %178 = vector.extract_strided_slice %0 {offsets = [4, 96], sizes = [1, 32], strides = [1, 1]} : vector<10x128xf32> to vector<1x32xf32>
    %179 = vector.extract_strided_slice %0 {offsets = [5, 0], sizes = [1, 32], strides = [1, 1]} : vector<10x128xf32> to vector<1x32xf32>
    %180 = vector.extract_strided_slice %0 {offsets = [5, 32], sizes = [1, 32], strides = [1, 1]} : vector<10x128xf32> to vector<1x32xf32>
    %181 = vector.extract_strided_slice %0 {offsets = [5, 64], sizes = [1, 64], strides = [1, 1]} : vector<10x128xf32> to vector<1x64xf32>
    %182 = vector.extract_strided_slice %0 {offsets = [6, 0], sizes = [1, 32], strides = [1, 1]} : vector<10x128xf32> to vector<1x32xf32>
    %183 = vector.extract_strided_slice %0 {offsets = [6, 32], sizes = [1, 32], strides = [1, 1]} : vector<10x128xf32> to vector<1x32xf32>
    %184 = vector.extract_strided_slice %0 {offsets = [6, 64], sizes = [1, 32], strides = [1, 1]} : vector<10x128xf32> to vector<1x32xf32>
    %185 = vector.shape_cast %172 : vector<2x8x32xf32> to vector<16x32xf32>
    %186 = arith.truncf %185 : vector<16x32xf32> to vector<16x32xbf16>
    %187 = vector.extract_strided_slice %174 {offsets = [0, 0], sizes = [32, 96], strides = [1, 1]} : vector<32x128xbf16> to vector<32x96xbf16>
    %cst_43 = arith.constant dense<0.000000e+00> : vector<16x96xf32>
    %188 = tpu.matmul %186, %187, %cst_43 {dimension_numbers = #tpu.dot_dimension_numbers<[1], [0], [0], [1], [0, 0, 1, 1], [], []>} : vector<16x32xbf16>, vector<32x96xbf16>, vector<16x96xf32> -> vector<16x96xf32>
    %189 = vector.broadcast %177 : vector<1x96xf32> to vector<16x96xf32>
    %190 = arith.addf %188, %189 : vector<16x96xf32>
    %191 = vector.extract_strided_slice %190 {offsets = [0, 0], sizes = [16, 16], strides = [1, 1]} : vector<16x96xf32> to vector<16x16xf32>
    %192 = vector.shape_cast %191 : vector<16x16xf32> to vector<2x8x16xf32>
    %193 = arith.truncf %192 : vector<2x8x16xf32> to vector<2x8x16xbf16>
    %194 = vector.extract_strided_slice %190 {offsets = [0, 32], sizes = [16, 16], strides = [1, 1]} : vector<16x96xf32> to vector<16x16xf32>
    %195 = vector.shape_cast %194 : vector<16x16xf32> to vector<2x8x16xf32>
    %196 = arith.truncf %195 : vector<2x8x16xf32> to vector<2x8x16xbf16>
    %197 = vector.extract_strided_slice %190 {offsets = [0, 64], sizes = [16, 16], strides = [1, 1]} : vector<16x96xf32> to vector<16x16xf32>
    %198 = vector.shape_cast %197 : vector<16x16xf32> to vector<2x8x16xf32>
    %199 = arith.truncf %198 : vector<2x8x16xf32> to vector<2x8x16xbf16>
    "tpu.trace_start"() <{level = 10 : i32, message = "bqd,bkd->bqk"}> : () -> ()
    %cst_44 = arith.constant dense<0.000000e+00> : vector<2x8x8xf32>
    %200 = tpu.matmul %193, %196, %cst_44 {dimension_numbers = #tpu.dot_dimension_numbers<[2], [2], [1], [1], [0, 0, 0, 1, 1, 1], [0], [0]>} : vector<2x8x16xbf16>, vector<2x8x16xbf16>, vector<2x8x8xf32> -> vector<2x8x8xf32>
    "tpu.trace_stop"() : () -> ()
    %201 = vector.shape_cast %1 : vector<2x8xf32> to vector<2x1x8xf32>
    %202 = vector.broadcast %201 : vector<2x1x8xf32> to vector<2x8x8xf32>
    %203 = arith.addf %200, %202 : vector<2x8x8xf32>
    %204 = math.exp %203 : vector<2x8x8xf32>
    %cst_45 = arith.constant dense<0.000000e+00> : vector<2x8xf32>
    %205 = vector.multi_reduction <add>, %204, %cst_45 [2] : vector<2x8x8xf32> to vector<2x8xf32>
    %206 = vector.shape_cast %205 : vector<2x8xf32> to vector<2x8x1xf32>
    %207 = tpu.reciprocal %206 {approx = true} : vector<2x8x1xf32> -> vector<2x8x1xf32>
    %208 = vector.broadcast %207 : vector<2x8x1xf32> to vector<2x8x8xf32>
    %209 = arith.mulf %204, %208 : vector<2x8x8xf32>
    %210 = arith.truncf %209 : vector<2x8x8xf32> to vector<2x8x8xbf16>
    "tpu.trace_start"() <{level = 10 : i32, message = "bqk,bkd->bqd"}> : () -> ()
    %cst_46 = arith.constant dense<0.000000e+00> : vector<2x8x16xf32>
    %211 = tpu.matmul %210, %199, %cst_46 {dimension_numbers = #tpu.dot_dimension_numbers<[2], [1], [1], [2], [0, 0, 0, 1, 1, 2], [0], [0]>} : vector<2x8x8xbf16>, vector<2x8x16xbf16>, vector<2x8x16xf32> -> vector<2x8x16xf32>
    "tpu.trace_stop"() : () -> ()
    %212 = vector.shape_cast %211 : vector<2x8x16xf32> to vector<16x16xf32>
    %213 = vector.extract_strided_slice %190 {offsets = [0, 16], sizes = [16, 16], strides = [1, 1]} : vector<16x96xf32> to vector<16x16xf32>
    %214 = vector.shape_cast %213 : vector<16x16xf32> to vector<2x8x16xf32>
    %215 = arith.truncf %214 : vector<2x8x16xf32> to vector<2x8x16xbf16>
    %216 = vector.extract_strided_slice %190 {offsets = [0, 48], sizes = [16, 16], strides = [1, 1]} : vector<16x96xf32> to vector<16x16xf32>
    %217 = vector.shape_cast %216 : vector<16x16xf32> to vector<2x8x16xf32>
    %218 = arith.truncf %217 : vector<2x8x16xf32> to vector<2x8x16xbf16>
    %219 = vector.extract_strided_slice %190 {offsets = [0, 80], sizes = [16, 16], strides = [1, 1]} : vector<16x96xf32> to vector<16x16xf32>
    %220 = vector.shape_cast %219 : vector<16x16xf32> to vector<2x8x16xf32>
    %221 = arith.truncf %220 : vector<2x8x16xf32> to vector<2x8x16xbf16>
    "tpu.trace_start"() <{level = 10 : i32, message = "bqd,bkd->bqk"}> : () -> ()
    %cst_47 = arith.constant dense<0.000000e+00> : vector<2x8x8xf32>
    %222 = tpu.matmul %215, %218, %cst_47 {dimension_numbers = #tpu.dot_dimension_numbers<[2], [2], [1], [1], [0, 0, 0, 1, 1, 1], [0], [0]>} : vector<2x8x16xbf16>, vector<2x8x16xbf16>, vector<2x8x8xf32> -> vector<2x8x8xf32>
    "tpu.trace_stop"() : () -> ()
    %223 = vector.shape_cast %1 : vector<2x8xf32> to vector<2x1x8xf32>
    %224 = vector.broadcast %223 : vector<2x1x8xf32> to vector<2x8x8xf32>
    %225 = arith.addf %222, %224 : vector<2x8x8xf32>
    %226 = math.exp %225 : vector<2x8x8xf32>
    %cst_48 = arith.constant dense<0.000000e+00> : vector<2x8xf32>
    %227 = vector.multi_reduction <add>, %226, %cst_48 [2] : vector<2x8x8xf32> to vector<2x8xf32>
    %228 = vector.shape_cast %227 : vector<2x8xf32> to vector<2x8x1xf32>
    %229 = tpu.reciprocal %228 {approx = true} : vector<2x8x1xf32> -> vector<2x8x1xf32>
    %230 = vector.broadcast %229 : vector<2x8x1xf32> to vector<2x8x8xf32>
    %231 = arith.mulf %226, %230 : vector<2x8x8xf32>
    %232 = arith.truncf %231 : vector<2x8x8xf32> to vector<2x8x8xbf16>
    "tpu.trace_start"() <{level = 10 : i32, message = "bqk,bkd->bqd"}> : () -> ()
    %cst_49 = arith.constant dense<0.000000e+00> : vector<2x8x16xf32>
    %233 = tpu.matmul %232, %221, %cst_49 {dimension_numbers = #tpu.dot_dimension_numbers<[2], [1], [1], [2], [0, 0, 0, 1, 1, 2], [0], [0]>} : vector<2x8x8xbf16>, vector<2x8x16xbf16>, vector<2x8x16xf32> -> vector<2x8x16xf32>
    "tpu.trace_stop"() : () -> ()
    %234 = vector.shape_cast %233 : vector<2x8x16xf32> to vector<16x16xf32>
    %235 = tpu.concatenate %212, %234 in 1 : vector<16x16xf32>, vector<16x16xf32> -> vector<16x32xf32>
    %236 = arith.truncf %235 : vector<16x32xf32> to vector<16x32xbf16>
    %237 = vector.extract_strided_slice %174 {offsets = [0, 96], sizes = [32, 32], strides = [1, 1]} : vector<32x128xbf16> to vector<32x32xbf16>
    %cst_50 = arith.constant dense<0.000000e+00> : vector<16x32xf32>
    %238 = tpu.matmul %236, %237, %cst_50 {dimension_numbers = #tpu.dot_dimension_numbers<[1], [0], [0], [1], [0, 0, 1, 1], [], []>} : vector<16x32xbf16>, vector<32x32xbf16>, vector<16x32xf32> -> vector<16x32xf32>
    %239 = vector.broadcast %178 : vector<1x32xf32> to vector<16x32xf32>
    %240 = arith.addf %238, %239 : vector<16x32xf32>
    %241 = vector.shape_cast %240 : vector<16x32xf32> to vector<2x8x32xf32>
    %242 = arith.addf %172, %241 : vector<2x8x32xf32>
    %cst_51 = arith.constant dense<0.000000e+00> : vector<2x8xf32>
    %243 = vector.multi_reduction <add>, %242, %cst_51 [2] : vector<2x8x32xf32> to vector<2x8xf32>
    %244 = vector.shape_cast %243 : vector<2x8xf32> to vector<2x8x1xf32>
    %cst_52 = arith.constant 3.200000e+01 : f32
    %245 = vector.broadcast %cst_52 : f32 to vector<2x8x1xf32>
    %246 = arith.divf %244, %245 : vector<2x8x1xf32>
    %247 = vector.broadcast %246 : vector<2x8x1xf32> to vector<2x8x32xf32>
    %248 = arith.subf %242, %247 : vector<2x8x32xf32>
    %249 = arith.mulf %248, %248 : vector<2x8x32xf32>
    %cst_53 = arith.constant dense<0.000000e+00> : vector<2x8xf32>
    %250 = vector.multi_reduction <add>, %249, %cst_53 [2] : vector<2x8x32xf32> to vector<2x8xf32>
    %251 = vector.shape_cast %250 : vector<2x8xf32> to vector<2x8x1xf32>
    %cst_54 = arith.constant 3.200000e+01 : f32
    %252 = vector.broadcast %cst_54 : f32 to vector<2x8x1xf32>
    %253 = arith.divf %251, %252 : vector<2x8x1xf32>
    %254 = vector.broadcast %246 : vector<2x8x1xf32> to vector<2x8x32xf32>
    %255 = arith.subf %242, %254 : vector<2x8x32xf32>
    %cst_55 = arith.constant 9.99999996E-13 : f32
    %256 = vector.broadcast %cst_55 : f32 to vector<2x8x1xf32>
    %257 = arith.addf %253, %256 : vector<2x8x1xf32>
    %258 = math.rsqrt %257 : vector<2x8x1xf32>
    %259 = vector.broadcast %258 : vector<2x8x1xf32> to vector<2x8x32xf32>
    %260 = arith.mulf %255, %259 : vector<2x8x32xf32>
    %261 = vector.shape_cast %179 : vector<1x32xf32> to vector<1x1x32xf32>
    %262 = vector.broadcast %261 : vector<1x1x32xf32> to vector<2x8x32xf32>
    %263 = arith.mulf %260, %262 : vector<2x8x32xf32>
    %264 = vector.shape_cast %180 : vector<1x32xf32> to vector<1x1x32xf32>
    %265 = vector.broadcast %264 : vector<1x1x32xf32> to vector<2x8x32xf32>
    %266 = arith.addf %263, %265 : vector<2x8x32xf32>
    %267 = vector.shape_cast %266 : vector<2x8x32xf32> to vector<16x32xf32>
    %268 = arith.truncf %267 : vector<16x32xf32> to vector<16x32xbf16>
    %269 = vector.extract_strided_slice %176 {offsets = [0, 0], sizes = [32, 64], strides = [1, 1]} : vector<64x128xbf16> to vector<32x64xbf16>
    %cst_56 = arith.constant dense<0.000000e+00> : vector<16x64xf32>
    %270 = tpu.matmul %268, %269, %cst_56 {dimension_numbers = #tpu.dot_dimension_numbers<[1], [0], [0], [1], [0, 0, 1, 1], [], []>} : vector<16x32xbf16>, vector<32x64xbf16>, vector<16x64xf32> -> vector<16x64xf32>
    %271 = vector.broadcast %181 : vector<1x64xf32> to vector<16x64xf32>
    %272 = arith.addf %270, %271 : vector<16x64xf32>
    %273 = arith.mulf %272, %272 : vector<16x64xf32>
    %274 = arith.mulf %272, %273 : vector<16x64xf32>
    %cst_57 = arith.constant 4.471500e-02 : f32
    %275 = vector.broadcast %cst_57 : f32 to vector<16x64xf32>
    %276 = arith.mulf %275, %274 : vector<16x64xf32>
    %277 = arith.addf %272, %276 : vector<16x64xf32>
    %cst_58 = arith.constant 0.797884583 : f32
    %278 = vector.broadcast %cst_58 : f32 to vector<16x64xf32>
    %279 = arith.mulf %278, %277 : vector<16x64xf32>
    %280 = math.tanh %279 : vector<16x64xf32>
    %cst_59 = arith.constant 1.000000e+00 : f32
    %281 = vector.broadcast %cst_59 : f32 to vector<16x64xf32>
    %282 = arith.addf %281, %280 : vector<16x64xf32>
    %cst_60 = arith.constant 5.000000e-01 : f32
    %283 = vector.broadcast %cst_60 : f32 to vector<16x64xf32>
    %284 = arith.mulf %283, %282 : vector<16x64xf32>
    %285 = arith.mulf %272, %284 : vector<16x64xf32>
    %286 = arith.truncf %285 : vector<16x64xf32> to vector<16x64xbf16>
    %287 = vector.extract_strided_slice %176 {offsets = [0, 64], sizes = [64, 32], strides = [1, 1]} : vector<64x128xbf16> to vector<64x32xbf16>
    %cst_61 = arith.constant dense<0.000000e+00> : vector<16x32xf32>
    %288 = tpu.matmul %286, %287, %cst_61 {dimension_numbers = #tpu.dot_dimension_numbers<[1], [0], [0], [1], [0, 0, 1, 1], [], []>} : vector<16x64xbf16>, vector<64x32xbf16>, vector<16x32xf32> -> vector<16x32xf32>
    %289 = vector.broadcast %182 : vector<1x32xf32> to vector<16x32xf32>
    %290 = arith.addf %288, %289 : vector<16x32xf32>
    %291 = vector.shape_cast %290 : vector<16x32xf32> to vector<2x8x32xf32>
    %292 = arith.addf %266, %291 : vector<2x8x32xf32>
    %cst_62 = arith.constant dense<0.000000e+00> : vector<2x8xf32>
    %293 = vector.multi_reduction <add>, %292, %cst_62 [2] : vector<2x8x32xf32> to vector<2x8xf32>
    %294 = vector.shape_cast %293 : vector<2x8xf32> to vector<2x8x1xf32>
    %cst_63 = arith.constant 3.200000e+01 : f32
    %295 = vector.broadcast %cst_63 : f32 to vector<2x8x1xf32>
    %296 = arith.divf %294, %295 : vector<2x8x1xf32>
    %297 = vector.broadcast %296 : vector<2x8x1xf32> to vector<2x8x32xf32>
    %298 = arith.subf %292, %297 : vector<2x8x32xf32>
    %299 = arith.mulf %298, %298 : vector<2x8x32xf32>
    %cst_64 = arith.constant dense<0.000000e+00> : vector<2x8xf32>
    %300 = vector.multi_reduction <add>, %299, %cst_64 [2] : vector<2x8x32xf32> to vector<2x8xf32>
    %301 = vector.shape_cast %300 : vector<2x8xf32> to vector<2x8x1xf32>
    %cst_65 = arith.constant 3.200000e+01 : f32
    %302 = vector.broadcast %cst_65 : f32 to vector<2x8x1xf32>
    %303 = arith.divf %301, %302 : vector<2x8x1xf32>
    %304 = vector.broadcast %296 : vector<2x8x1xf32> to vector<2x8x32xf32>
    %305 = arith.subf %292, %304 : vector<2x8x32xf32>
    %cst_66 = arith.constant 9.99999996E-13 : f32
    %306 = vector.broadcast %cst_66 : f32 to vector<2x8x1xf32>
    %307 = arith.addf %303, %306 : vector<2x8x1xf32>
    %308 = math.rsqrt %307 : vector<2x8x1xf32>
    %309 = vector.broadcast %308 : vector<2x8x1xf32> to vector<2x8x32xf32>
    %310 = arith.mulf %305, %309 : vector<2x8x32xf32>
    %311 = vector.shape_cast %183 : vector<1x32xf32> to vector<1x1x32xf32>
    %312 = vector.broadcast %311 : vector<1x1x32xf32> to vector<2x8x32xf32>
    %313 = arith.mulf %310, %312 : vector<2x8x32xf32>
    %314 = vector.shape_cast %184 : vector<1x32xf32> to vector<1x1x32xf32>
    %315 = vector.broadcast %314 : vector<1x1x32xf32> to vector<2x8x32xf32>
    %316 = arith.addf %313, %315 : vector<2x8x32xf32>
    %317 = vector.extract_strided_slice %316 {offsets = [0, 0, 0], sizes = [2, 1, 32], strides = [1, 1, 1]} : vector<2x8x32xf32> to vector<2x1x32xf32>
    %318 = vector.shape_cast %317 : vector<2x1x32xf32> to vector<2x32xf32>
    %319 = vector.extract_strided_slice %0 {offsets = [7, 0], sizes = [1, 32], strides = [1, 1]} : vector<10x128xf32> to vector<1x32xf32>
    %320 = vector.extract_strided_slice %0 {offsets = [7, 32], sizes = [1, 32], strides = [1, 1]} : vector<10x128xf32> to vector<1x32xf32>
    %c1_67 = arith.constant 1 : index
    %c0_68 = arith.constant 0 : index
    %c0_69 = arith.constant 0 : index
    %321 = vector.load %arg2[%c1_67, %c0_68, %c0_69] : memref<2x64x128xbf16, #tpu.memory_space<vmem>>, vector<1x64x128xbf16>
    %322 = vector.shape_cast %321 : vector<1x64x128xbf16> to vector<64x128xbf16>
    %323 = vector.extract_strided_slice %322 {offsets = [0, 96], sizes = [32, 32], strides = [1, 1]} : vector<64x128xbf16> to vector<32x32xbf16>
    %324 = vector.extract_strided_slice %322 {offsets = [32, 96], sizes = [32, 32], strides = [1, 1]} : vector<64x128xbf16> to vector<32x32xbf16>
    %325 = arith.truncf %318 : vector<2x32xf32> to vector<2x32xbf16>
    %cst_70 = arith.constant dense<0.000000e+00> : vector<2x32xf32>
    %326 = tpu.matmul %325, %323, %cst_70 {dimension_numbers = #tpu.dot_dimension_numbers<[1], [0], [0], [1], [0, 0, 1, 1], [], []>} : vector<2x32xbf16>, vector<32x32xbf16>, vector<2x32xf32> -> vector<2x32xf32>
    %327 = vector.broadcast %319 : vector<1x32xf32> to vector<2x32xf32>
    %328 = arith.addf %326, %327 : vector<2x32xf32>
    %329 = math.tanh %328 : vector<2x32xf32>
    %330 = arith.truncf %329 : vector<2x32xf32> to vector<2x32xbf16>
    %cst_71 = arith.constant dense<0.000000e+00> : vector<2x32xf32>
    %331 = tpu.matmul %330, %324, %cst_71 {dimension_numbers = #tpu.dot_dimension_numbers<[1], [0], [0], [1], [0, 0, 1, 1], [], []>} : vector<2x32xbf16>, vector<32x32xbf16>, vector<2x32xf32> -> vector<2x32xf32>
    %332 = vector.broadcast %320 : vector<1x32xf32> to vector<2x32xf32>
    %333 = arith.addf %331, %332 : vector<2x32xf32>
    %cst_72 = arith.constant 0.000000e+00 : f32
    %334 = vector.broadcast %cst_72 : f32 to vector<2x32xf32>
    %335 = tpu.concatenate %333, %318, %329, %334 in 1 : vector<2x32xf32>, vector<2x32xf32>, vector<2x32xf32>, vector<2x32xf32> -> vector<2x128xf32>
    %c0_73 = arith.constant 0 : index
    %c0_74 = arith.constant 0 : index
    %336 = vector.load %arg4[%c0_73, %c0_74] : memref<2x128xf32, #tpu.memory_space<vmem>>, vector<2x128xf32>
    tpu.vector_store %arg4[%c0_73, %c0_74], %335 {strides = array<i32>} : memref<2x128xf32, #tpu.memory_space<vmem>>, vector<2x128xf32>,
    return
  }
}

</mosaic_0001>

<llo_original>
// kernel: text_bert_forward.1
$region0: #{text_bert_forward.1}
  #allocation0 [shape = 'u32[]', space=smem, size = 0x4, offset = 0x4, fixed_abs, tag = 'smem constant byte address 0x4 - core index']
  #allocation1 [shape = 'u32[72,128]{1,0:T(1,128)}', space=vmem, size = 0x9000, scoped, tag = 'internal scratch']
  %s0 = inlined_call_operand.vmem [shape: f32[2,8,32], index: 0, kind: input, shape index: {}]
  %s1 = inlined_call_operand.vmem [shape: bf16[2,32,128], index: 1, kind: input, shape index: {}]
  %s2 = inlined_call_operand.vmem [shape: bf16[2,64,128], index: 2, kind: input, shape index: {}]
  %s3 = inlined_call_operand.vmem [shape: f32[10,128], index: 3, kind: input, shape index: {}]
  %s4 = inlined_call_operand.vmem [shape: f32[2,128], index: 4, kind: output, shape index: {}]
  %s5 = sld [smem:[#allocation0]]
  $region26: #{text_bert_forward.1} parent=0
    _
  %s7 = ssub.s32 1, %s5
  %s8 = scalar_select 0, %s7, %s5
  // Predicated region
  $region2: #{text_bert_forward.1} parent=0 // pred_check
    _
  $region3: #{text_bert_forward.1} parent=0 // pred_check_branch
    %10 = sbr.rel (0) target = $region5
  $region4: #{text_bert_forward.1} parent=0 // pred_region
    _
  $region5: #{text_bert_forward.1} parent=0 // pred_fallthru
    _
  // Predicated region
  $region6: #{text_bert_forward.1} parent=0 // pred_check
    _
  $region7: #{text_bert_forward.1} parent=0 // pred_check_branch
    %12 = sbr.rel (0) target = $region9
  $region8: #{text_bert_forward.1} parent=0 // pred_region
    _
  $region9: #{text_bert_forward.1} parent=0 // pred_fallthru
    _
  // Predicated region
  $region10: #{text_bert_forward.1} parent=0 // pred_check
    _
  $region11: #{text_bert_forward.1} parent=0 // pred_check_branch
    %14 = sbr.rel (0) target = $region13
  $region12: #{text_bert_forward.1} parent=0 // pred_region
    _
  $region13: #{text_bert_forward.1} parent=0 // pred_fallthru
    _
  // Predicated region
  $region14: #{text_bert_forward.1} parent=0 // pred_check
    _
  $region15: #{text_bert_forward.1} parent=0 // pred_check_branch
    %16 = sbr.rel (0) target = $region17
  $region16: #{text_bert_forward.1} parent=0 // pred_region
    _
  $region17: #{text_bert_forward.1} parent=0 // pred_fallthru
    _
  %v18 = vld [vmem:[%s3] sm:$0xff]
  %v19 = vld [vmem:[%s3 + $0x8] sm:$0x3]
  %v20 = vld [vmem:[%s0] sm:$0xff]
  %v21 = vld [vmem:[%s0 + $0x8] sm:$0xff]
  %vm22 = vcmask 261120
  %v23 = vsel %vm22, %v20, 0.0
  %24 = vadd.xlane.f32.xlu0 %v23
  %v25 = vpop.xlane.xlu0 %24
  %v26 = vsel %vm22, %v21, 0.0
  %27 = vadd.xlane.f32.xlu0 %v26
  %v28 = vpop.xlane.xlu0 %27
  %v29 = vrcp.pop 32.0
  %v30 = vmul.f32 32.0, %v29
  %v31 = vsub.f32 1.0, %v30
  %v32 = vmul.f32 %v29, %v31
  %v33 = vadd.f32 %v29, %v32
  %vm34 = vweird.f32 %v29
  %v35 = vsel %vm34, %v29, %v33
  %v36 = vmul.f32 %v25, %v35
  %v37 = vmul.f32 %v28, %v35
  %v38 = vsub.f32 %v20, %v36
  %v39 = vsub.f32 %v21, %v37
  %v40 = vmul.f32 %v38, %v38
  %v41 = vmul.f32 %v39, %v39
  %v42 = vsel %vm22, %v40, 0.0
  %43 = vadd.xlane.f32.xlu0 %v42
  %v44 = vpop.xlane.xlu0 %43
  %v45 = vsel %vm22, %v41, 0.0
  %46 = vadd.xlane.f32.xlu0 %v45
  %v47 = vpop.xlane.xlu0 %46
  %v48 = vmul.f32 %v44, %v35
  %v49 = vmul.f32 %v47, %v35
  %v50 = vadd.f32 %v48, 1e-12
  %v51 = vadd.f32 %v49, 1e-12
  %v52 = vrsqrt.pop %v50
  %v53 = vmul.f32 %v52, %v50
  %v54 = vmul.f32 %v53, %v52
  %v55 = vmul.f32 0.5, %v54
  %v56 = vsub.f32 1.5, %v55
  %v57 = vmul.f32 %v52, %v56
  %vm58 = vweird.f32 %v50
  %vm59 = vweird.f32 %v52
  %vm60 = vmor %vm58, %vm59
  %v61 = vsel %vm60, %v52, %v57
  %v62 = vrsqrt.pop %v51
  %v63 = vmul.f32 %v62, %v51
  %v64 = vmul.f32 %v63, %v62
  %v65 = vmul.f32 0.5, %v64
  %v66 = vsub.f32 1.5, %v65
  %v67 = vmul.f32 %v62, %v66
  %vm68 = vweird.f32 %v51
  %vm69 = vweird.f32 %v62
  %vm70 = vmor %vm68, %vm69
  %v71 = vsel %vm70, %v62, %v67
  %v72 = vmul.f32 %v38, %v61
  %v73 = vmul.f32 %v39, %v71
  %v74 = vperm.slane %v18, 0
  %v75 = vmul.f32 %v72, %v74
  %v76 = vmul.f32 %v73, %v74
  %78 = vrot.lane.b32.xlu0 %v74, 96
  %v79 = vpop.permute.xlu0 %78
  %v81 = vadd.f32 %v75, %v79
  %v82 = vadd.f32 %v76, %v79
  %v83 = vld [vmem:[%s1] sm:$0xf]
  %v84 = vld [vmem:[%s1 + $0x4] sm:$0xf]
  %v85 = vld [vmem:[%s1 + $0x8] sm:$0xf]
  %v86 = vld [vmem:[%s1 + $0xc] sm:$0xf]
  %v87 = vld [vmem:[%s2] sm:$0xf]
  %v88 = vld [vmem:[%s2 + $0x4] sm:$0xf]
  %v89 = vld [vmem:[%s2 + $0x8] sm:$0xf]
  %v90 = vld [vmem:[%s2 + $0xc] sm:$0xf]
  %v91 = vld [vmem:[%s2 + $0x10] sm:$0xf]
  %v92 = vld [vmem:[%s2 + $0x14] sm:$0xf]
  %v93 = vld [vmem:[%s2 + $0x18] sm:$0xf]
  %v94 = vld [vmem:[%s2 + $0x1c] sm:$0xf]
  %v95 = vpack.c.bf16 %v82, %v81
  %v96 = vperm.slane %v18, 1
  %v101 = vunpack.c.l.b16 %v83
  %v102 = vunpack.c.l.b16 %v84
  %v103 = vunpack.c.l.b16 %v85
  %v104 = vunpack.c.l.b16 %v86
  %v105 = vpack.c.b16 %v102, %v101
  %v106 = vpack.c.b16 %v104, %v103
  %v110 = vsel %vm22, %v95, 0
  %112 = vmatpush.bf16.msra.mxu0 0
  %113 = vmatpush.bf16.msra.mxu0 0
  %114 = vmatpush.bf16.msra.mxu0 0
  %115 = vmatpush.bf16.msra.mxu0 0
  %116 = vmatpush.bf16.msra.mxu0 0
  %117 = vmatpush.bf16.msra.mxu0 0
  %118 = vmatpush.bf16.msra.mxu0 %v106
  %119 = vmatpush.bf16.msra.mxu0 %v105
  %120 = vmatmul.bf16.gmra.mxu0 %v110
  %v121 = vpop.f32.mrf.mxu0
  %v122 = vadd.f32 %v96, %v121
  %v123 = vpop.f32.mrf.mxu0
  %v124 = vadd.f32 %v96, %v123
  %125 = vdwg.mxu0
  %v126 = vpack.c.bf16 %v122, %v122
  %v127 = vpack.c.bf16 %v124, %v124
  %v129 = vrot.slane %v19, 1
  %v130 = vperm.slane %v19, 0
  %v131 = vperm.slane %v129, 0
  %v135 = vunpack.c.l.b16 %v126
  %v136 = vpack.c.b16 %v135, %v135
  %137 = vrot.lane.b32.xlu0 %v136, 96
  %v138 = vpop.permute.xlu0 %137
  %vm139 = vcmask 130048
  %v141 = vsel %vm139, %v126, 0
  %v144 = vsel %vm139, %v138, 0
  %146 = vmatpush.bf16.xpose.msra.mxu0 0
  %147 = vmatpush.bf16.xpose.msra.mxu0 0
  %148 = vmatpush.bf16.xpose.msra.mxu0 0
  %149 = vmatpush.bf16.xpose.msra.mxu0 0
  %150 = vmatpush.bf16.xpose.msra.mxu0 0
  %151 = vmatpush.bf16.xpose.msra.mxu0 0
  %152 = vmatpush.bf16.xpose.msra.mxu0 0
  %153 = vmatpush.bf16.xpose.msra.mxu0 %v144
  %154 = vmatmul.bf16.gmra.mxu0 %v141
  %v155 = vpop.f32.mrf.mxu0
  %v156 = vadd.f32 %v130, %v155
  %v157 = vpop.f32.mrf.mxu0
  %158 = vdwg.mxu0
  %v160 = vunpack.c.l.b16 %v127
  %v161 = vpack.c.b16 %v160, %v160
  %162 = vrot.lane.b32.xlu0 %v161, 96
  %v163 = vpop.permute.xlu0 %162
  %v165 = vsel %vm139, %v127, 0
  %v168 = vsel %vm139, %v163, 0
  %170 = vmatpush.bf16.xpose.msra.mxu0 0
  %171 = vmatpush.bf16.xpose.msra.mxu0 0
  %172 = vmatpush.bf16.xpose.msra.mxu0 0
  %173 = vmatpush.bf16.xpose.msra.mxu0 0
  %174 = vmatpush.bf16.xpose.msra.mxu0 0
  %175 = vmatpush.bf16.xpose.msra.mxu0 0
  %176 = vmatpush.bf16.xpose.msra.mxu0 0
  %177 = vmatpush.bf16.xpose.msra.mxu0 %v168
  %178 = vmatmul.bf16.gmra.mxu0 %v165
  %v179 = vpop.f32.mrf.mxu0
  %v180 = vadd.f32 %v131, %v179
  %v181 = vpop.f32.mrf.mxu0
  %182 = vdwg.mxu0
  %v183 = vmul.f32 %v156, 1.442695
  %v184 = vpow.pop %v183
  %v185 = vmul.f32 %v180, 1.442695
  %v186 = vpow.pop %v185
  %vm187 = vcmask 64512
  %v188 = vsel %vm187, %v184, 0.0
  %189 = vadd.xlane.f32.xlu0 %v188
  %v190 = vpop.xlane.xlu0 %189
  %v191 = vsel %vm187, %v186, 0.0
  %192 = vadd.xlane.f32.xlu0 %v191
  %v193 = vpop.xlane.xlu0 %192
  %v194 = vrcp.pop %v190
  %v195 = vrcp.pop %v193
  %v196 = vmul.f32 %v184, %v194
  %v197 = vmul.f32 %v186, %v195
  %v198 = vpack.c.bf16 %v196, %v196
  %v199 = vpack.c.bf16 %v197, %v197
  %200 = vrot.lane.b32.xlu0 %v136, 64
  %v201 = vpop.permute.xlu0 %200
  %v203 = vsel %vm187, %v198, 0
  %vm205 = vcmask 1043456
  %v207 = vsel %vm205, %v201, 0
  %209 = vmatpush.bf16.msra.mxu0 0
  %210 = vmatpush.bf16.msra.mxu0 0
  %211 = vmatpush.bf16.msra.mxu0 0
  %212 = vmatpush.bf16.msra.mxu0 0
  %213 = vmatpush.bf16.msra.mxu0 0
  %214 = vmatpush.bf16.msra.mxu0 0
  %215 = vmatpush.bf16.msra.mxu0 0
  %216 = vmatpush.bf16.msra.mxu0 %v207
  %217 = vmatmul.bf16.gmra.mxu0 %v203
  %v218 = vpop.f32.mrf.mxu0
  %v219 = vadd.f32 0.0, %v218
  %v220 = vpop.f32.mrf.mxu0
  %221 = vdwg.mxu0
  %222 = vrot.lane.b32.xlu0 %v161, 64
  %v223 = vpop.permute.xlu0 %222
  %v225 = vsel %vm187, %v199, 0
  %v228 = vsel %vm205, %v223, 0
  %230 = vmatpush.bf16.msra.mxu0 0
  %231 = vmatpush.bf16.msra.mxu0 0
  %232 = vmatpush.bf16.msra.mxu0 0
  %233 = vmatpush.bf16.msra.mxu0 0
  %234 = vmatpush.bf16.msra.mxu0 0
  %235 = vmatpush.bf16.msra.mxu0 0
  %236 = vmatpush.bf16.msra.mxu0 0
  %237 = vmatpush.bf16.msra.mxu0 %v228
  %238 = vmatmul.bf16.gmra.mxu0 %v225
  %v239 = vpop.f32.mrf.mxu0
  %v240 = vadd.f32 0.0, %v239
  %v241 = vpop.f32.mrf.mxu0
  %242 = vdwg.mxu0
  %243 = vrot.lane.b32.xlu0 %v136, 112
  %v244 = vpop.permute.xlu0 %243
  %245 = vrot.lane.b32.xlu0 %v136, 80
  %v246 = vpop.permute.xlu0 %245
  %v248 = vsel %vm139, %v244, 0
  %v251 = vsel %vm139, %v246, 0
  %253 = vmatpush.bf16.xpose.msra.mxu0 0
  %254 = vmatpush.bf16.xpose.msra.mxu0 0
  %255 = vmatpush.bf16.xpose.msra.mxu0 0
  %256 = vmatpush.bf16.xpose.msra.mxu0 0
  %257 = vmatpush.bf16.xpose.msra.mxu0 0
  %258 = vmatpush.bf16.xpose.msra.mxu0 0
  %259 = vmatpush.bf16.xpose.msra.mxu0 0
  %260 = vmatpush.bf16.xpose.msra.mxu0 %v251
  %261 = vmatmul.bf16.gmra.mxu0 %v248
  %v262 = vpop.f32.mrf.mxu0
  %v263 = vadd.f32 %v130, %v262
  %v264 = vpop.f32.mrf.mxu0
  %265 = vdwg.mxu0
  %266 = vrot.lane.b32.xlu0 %v161, 112
  %v267 = vpop.permute.xlu0 %266
  %268 = vrot.lane.b32.xlu0 %v161, 80
  %v269 = vpop.permute.xlu0 %268
  %v271 = vsel %vm139, %v267, 0
  %v274 = vsel %vm139, %v269, 0
  %276 = vmatpush.bf16.xpose.msra.mxu0 0
  %277 = vmatpush.bf16.xpose.msra.mxu0 0
  %278 = vmatpush.bf16.xpose.msra.mxu0 0
  %279 = vmatpush.bf16.xpose.msra.mxu0 0
  %280 = vmatpush.bf16.xpose.msra.mxu0 0
  %281 = vmatpush.bf16.xpose.msra.mxu0 0
  %282 = vmatpush.bf16.xpose.msra.mxu0 0
  %283 = vmatpush.bf16.xpose.msra.mxu0 %v274
  %284 = vmatmul.bf16.gmra.mxu0 %v271
  %v285 = vpop.f32.mrf.mxu0
  %v286 = vadd.f32 %v131, %v285
  %v287 = vpop.f32.mrf.mxu0
  %288 = vdwg.mxu0
  %v289 = vmul.f32 %v263, 1.442695
  %v290 = vpow.pop %v289
  %v291 = vmul.f32 %v286, 1.442695
  %v292 = vpow.pop %v291
  %v293 = vsel %vm187, %v290, 0.0
  %294 = vadd.xlane.f32.xlu0 %v293
  %v295 = vpop.xlane.xlu0 %294
  %v296 = vsel %vm187, %v292, 0.0
  %297 = vadd.xlane.f32.xlu0 %v296
  %v298 = vpop.xlane.xlu0 %297
  %v299 = vrcp.pop %v295
  %v300 = vrcp.pop %v298
  %v301 = vmul.f32 %v290, %v299
  %v302 = vmul.f32 %v292, %v300
  %v303 = vpack.c.bf16 %v301, %v301
  %v304 = vpack.c.bf16 %v302, %v302
  %305 = vrot.lane.b32.xlu0 %v136, 48
  %v306 = vpop.permute.xlu0 %305
  %v308 = vsel %vm187, %v303, 0
  %v311 = vsel %vm205, %v306, 0
  %313 = vmatpush.bf16.msra.mxu0 0
  %314 = vmatpush.bf16.msra.mxu0 0
  %315 = vmatpush.bf16.msra.mxu0 0
  %316 = vmatpush.bf16.msra.mxu0 0
  %317 = vmatpush.bf16.msra.mxu0 0
  %318 = vmatpush.bf16.msra.mxu0 0
  %319 = vmatpush.bf16.msra.mxu0 0
  %320 = vmatpush.bf16.msra.mxu0 %v311
  %321 = vmatmul.bf16.gmra.mxu0 %v308
  %v322 = vpop.f32.mrf.mxu0
  %v323 = vadd.f32 0.0, %v322
  %v324 = vpop.f32.mrf.mxu0
  %325 = vdwg.mxu0
  %326 = vrot.lane.b32.xlu0 %v161, 48
  %v327 = vpop.permute.xlu0 %326
  %v329 = vsel %vm187, %v304, 0
  %v332 = vsel %vm205, %v327, 0
  %334 = vmatpush.bf16.msra.mxu0 0
  %335 = vmatpush.bf16.msra.mxu0 0
  %336 = vmatpush.bf16.msra.mxu0 0
  %337 = vmatpush.bf16.msra.mxu0 0
  %338 = vmatpush.bf16.msra.mxu0 0
  %339 = vmatpush.bf16.msra.mxu0 0
  %340 = vmatpush.bf16.msra.mxu0 0
  %341 = vmatpush.bf16.msra.mxu0 %v332
  %342 = vmatmul.bf16.gmra.mxu0 %v329
  %v343 = vpop.f32.mrf.mxu0
  %v344 = vadd.f32 0.0, %v343
  %v345 = vpop.f32.mrf.mxu0
  %346 = vdwg.mxu0
  %349 = vrot.lane.b32.xlu0 %v323, 16
  %v350 = vpop.permute.xlu0 %349
  %351 = vrot.lane.b32.xlu0 %v344, 16
  %v352 = vpop.permute.xlu0 %351
  %v355 = vsel %vm139, %v219, %v350
  %v356 = vsel %vm139, %v240, %v352
  %v357 = vpack.c.bf16 %v356, %v355
  %358 = vrot.lane.b32.xlu0 %v105, 32
  %v359 = vpop.permute.xlu0 %358
  %360 = vrot.lane.b32.xlu0 %v106, 32
  %v361 = vpop.permute.xlu0 %360
  %365 = vrot.lane.b32.xlu0 %v96, 32
  %v366 = vpop.permute.xlu0 %365
  %v369 = vsel %vm22, %v357, 0
  %371 = vmatpush.bf16.msra.mxu0 0
  %372 = vmatpush.bf16.msra.mxu0 0
  %373 = vmatpush.bf16.msra.mxu0 0
  %374 = vmatpush.bf16.msra.mxu0 0
  %375 = vmatpush.bf16.msra.mxu0 0
  %376 = vmatpush.bf16.msra.mxu0 0
  %377 = vmatpush.bf16.msra.mxu0 %v361
  %378 = vmatpush.bf16.msra.mxu0 %v359
  %379 = vmatmul.bf16.gmra.mxu0 %v369
  %v380 = vpop.f32.mrf.mxu0
  %v381 = vadd.f32 %v366, %v380
  %v382 = vpop.f32.mrf.mxu0
  %v383 = vadd.f32 %v366, %v382
  %384 = vdwg.mxu0
  %v385 = vadd.f32 %v81, %v381
  %v386 = vadd.f32 %v82, %v383
  %v387 = vsel %vm22, %v385, 0.0
  %388 = vadd.xlane.f32.xlu0 %v387
  %v389 = vpop.xlane.xlu0 %388
  %v390 = vsel %vm22, %v386, 0.0
  %391 = vadd.xlane.f32.xlu0 %v390
  %v392 = vpop.xlane.xlu0 %391
  %v393 = vmul.f32 %v389, %v35
  %v394 = vmul.f32 %v392, %v35
  %v395 = vsub.f32 %v385, %v393
  %v396 = vsub.f32 %v386, %v394
  %v397 = vmul.f32 %v395, %v395
  %v398 = vmul.f32 %v396, %v396
  %v399 = vsel %vm22, %v397, 0.0
  %400 = vadd.xlane.f32.xlu0 %v399
  %v401 = vpop.xlane.xlu0 %400
  %v402 = vsel %vm22, %v398, 0.0
  %403 = vadd.xlane.f32.xlu0 %v402
  %v404 = vpop.xlane.xlu0 %403
  %v405 = vmul.f32 %v401, %v35
  %v406 = vmul.f32 %v404, %v35
  %v407 = vadd.f32 %v405, 1e-12
  %v408 = vadd.f32 %v406, 1e-12
  %v409 = vrsqrt.pop %v407
  %v410 = vmul.f32 %v409, %v407
  %v411 = vmul.f32 %v410, %v409
  %v412 = vmul.f32 0.5, %v411
  %v413 = vsub.f32 1.5, %v412
  %v414 = vmul.f32 %v409, %v413
  %vm415 = vweird.f32 %v407
  %vm416 = vweird.f32 %v409
  %vm417 = vmor %vm415, %vm416
  %v418 = vsel %vm417, %v409, %v414
  %v419 = vrsqrt.pop %v408
  %v420 = vmul.f32 %v419, %v408
  %v421 = vmul.f32 %v420, %v419
  %v422 = vmul.f32 0.5, %v421
  %v423 = vsub.f32 1.5, %v422
  %v424 = vmul.f32 %v419, %v423
  %vm425 = vweird.f32 %v408
  %vm426 = vweird.f32 %v419
  %vm427 = vmor %vm425, %vm426
  %v428 = vsel %vm427, %v419, %v424
  %v429 = vmul.f32 %v395, %v418
  %v430 = vmul.f32 %v396, %v428
  %v431 = vperm.slane %v18, 2
  %v432 = vmul.f32 %v429, %v431
  %v433 = vmul.f32 %v430, %v431
  %435 = vrot.lane.b32.xlu0 %v431, 96
  %v436 = vpop.permute.xlu0 %435
  %v438 = vadd.f32 %v432, %v436
  %v439 = vadd.f32 %v433, %v436
  %v440 = vpack.c.bf16 %v439, %v438
  %v445 = vunpack.c.l.b16 %v87
  %v446 = vunpack.c.l.b16 %v88
  %v447 = vunpack.c.l.b16 %v89
  %v448 = vunpack.c.l.b16 %v90
  %v449 = vpack.c.b16 %v446, %v445
  %v450 = vpack.c.b16 %v448, %v447
  %453 = vrot.lane.b32.xlu0 %v431, 64
  %v454 = vpop.permute.xlu0 %453
  %v457 = vsel %vm22, %v440, 0
  %459 = vmatpush.bf16.msra.mxu0 0
  %460 = vmatpush.bf16.msra.mxu0 0
  %461 = vmatpush.bf16.msra.mxu0 0
  %462 = vmatpush.bf16.msra.mxu0 0
  %463 = vmatpush.bf16.msra.mxu0 0
  %464 = vmatpush.bf16.msra.mxu0 0
  %465 = vmatpush.bf16.msra.mxu0 %v450
  %466 = vmatpush.bf16.msra.mxu0 %v449
  %467 = vmatmul.bf16.gmra.mxu0 %v457
  %v468 = vpop.f32.mrf.mxu0
  %v469 = vadd.f32 %v454, %v468
  %v470 = vpop.f32.mrf.mxu0
  %v471 = vadd.f32 %v454, %v470
  %472 = vdwg.mxu0
  %v473 = vmul.f32 %v469, %v469
  %v474 = vmul.f32 %v471, %v471
  %v475 = vmul.f32 %v469, %v473
  %v476 = vmul.f32 %v471, %v474
  %v477 = vmul.f32 %v475, 0.044715
  %v478 = vmul.f32 %v476, 0.044715
  %v479 = vadd.f32 %v469, %v477
  %v480 = vadd.f32 %v471, %v478
  %v481 = vmul.f32 %v479, 0.7978846
  %v482 = vmul.f32 %v480, 0.7978846
  %v483 = vtanh.pop %v481
  %v484 = vtanh.pop %v482
  %v485 = vadd.f32 %v483, 1.0
  %v486 = vadd.f32 %v484, 1.0
  %v487 = vmul.f32 %v485, 0.5
  %v488 = vmul.f32 %v486, 0.5
  %v489 = vmul.f32 %v469, %v487
  %v490 = vmul.f32 %v471, %v488
  %v491 = vpack.c.bf16 %v490, %v489
  %v492 = vperm.slane %v18, 3
  %v497 = vunpack.c.l.b16 %v91
  %v498 = vunpack.c.l.b16 %v92
  %v499 = vunpack.c.l.b16 %v93
  %v500 = vunpack.c.l.b16 %v94
  %v501 = vpack.c.b16 %v498, %v497
  %v502 = vpack.c.b16 %v500, %v499
  %503 = vrot.lane.b32.xlu0 %v449, 64
  %v504 = vpop.permute.xlu0 %503
  %505 = vrot.lane.b32.xlu0 %v450, 64
  %v506 = vpop.permute.xlu0 %505
  %507 = vrot.lane.b32.xlu0 %v501, 64
  %v508 = vpop.permute.xlu0 %507
  %509 = vrot.lane.b32.xlu0 %v502, 64
  %v510 = vpop.permute.xlu0 %509
  %vm515 = vcmask 523264
  %v517 = vsel %vm515, %v491, 0
  %519 = vmatpush.bf16.msra.mxu0 0
  %520 = vmatpush.bf16.msra.mxu0 0
  %521 = vmatpush.bf16.msra.mxu0 0
  %522 = vmatpush.bf16.msra.mxu0 0
  %523 = vmatpush.bf16.msra.mxu0 %v510
  %524 = vmatpush.bf16.msra.mxu0 %v508
  %525 = vmatpush.bf16.msra.mxu0 %v506
  %526 = vmatpush.bf16.msra.mxu0 %v504
  %527 = vmatmul.bf16.gmra.mxu0 %v517
  %v528 = vpop.f32.mrf.mxu0
  %v529 = vadd.f32 %v492, %v528
  %v530 = vpop.f32.mrf.mxu0
  %v531 = vadd.f32 %v492, %v530
  %532 = vdwg.mxu0
  %v533 = vadd.f32 %v438, %v529
  %v534 = vadd.f32 %v439, %v531
  %v535 = vsel %vm22, %v533, 0.0
  %536 = vadd.xlane.f32.xlu0 %v535
  %v537 = vpop.xlane.xlu0 %536
  %v538 = vsel %vm22, %v534, 0.0
  %539 = vadd.xlane.f32.xlu0 %v538
  %v540 = vpop.xlane.xlu0 %539
  %v541 = vmul.f32 %v537, %v35
  %v542 = vmul.f32 %v540, %v35
  %v543 = vsub.f32 %v533, %v541
  %v544 = vsub.f32 %v534, %v542
  %v545 = vmul.f32 %v543, %v543
  %v546 = vmul.f32 %v544, %v544
  %v547 = vsel %vm22, %v545, 0.0
  %548 = vadd.xlane.f32.xlu0 %v547
  %v549 = vpop.xlane.xlu0 %548
  %v550 = vsel %vm22, %v546, 0.0
  %551 = vadd.xlane.f32.xlu0 %v550
  %v552 = vpop.xlane.xlu0 %551
  %v553 = vmul.f32 %v549, %v35
  %v554 = vmul.f32 %v552, %v35
  %v555 = vadd.f32 %v553, 1e-12
  %v556 = vadd.f32 %v554, 1e-12
  %v557 = vrsqrt.pop %v555
  %v558 = vmul.f32 %v557, %v555
  %v559 = vmul.f32 %v558, %v557
  %v560 = vmul.f32 0.5, %v559
  %v561 = vsub.f32 1.5, %v560
  %v562 = vmul.f32 %v557, %v561
  %vm563 = vweird.f32 %v555
  %vm564 = vweird.f32 %v557
  %vm565 = vmor %vm563, %vm564
  %v566 = vsel %vm565, %v557, %v562
  %v567 = vrsqrt.pop %v556
  %v568 = vmul.f32 %v567, %v556
  %v569 = vmul.f32 %v568, %v567
  %v570 = vmul.f32 0.5, %v569
  %v571 = vsub.f32 1.5, %v570
  %v572 = vmul.f32 %v567, %v571
  %vm573 = vweird.f32 %v556
  %vm574 = vweird.f32 %v567
  %vm575 = vmor %vm573, %vm574
  %v576 = vsel %vm575, %v567, %v572
  %v577 = vmul.f32 %v543, %v566
  %v578 = vmul.f32 %v544, %v576
  %580 = vrot.lane.b32.xlu0 %v492, 96
  %v581 = vpop.permute.xlu0 %580
  %v583 = vmul.f32 %v577, %v581
  %v584 = vmul.f32 %v578, %v581
  %585 = vrot.lane.b32.xlu0 %v492, 64
  %v586 = vpop.permute.xlu0 %585
  %v588 = vadd.f32 %v583, %v586
  %v589 = vadd.f32 %v584, %v586
  %s590 = scalar_lea.vmem %s1, 16
  %v591 = vld [vmem:[%s590] sm:$0xf]
  %v592 = vld [vmem:[%s590 + $0x4] sm:$0xf]
  %v593 = vld [vmem:[%s590 + $0x8] sm:$0xf]
  %v594 = vld [vmem:[%s590 + $0xc] sm:$0xf]
  %s595 = scalar_lea.vmem %s2, 32
  %v596 = vld [vmem:[%s595] sm:$0xf]
  %v597 = vld [vmem:[%s595 + $0x4] sm:$0xf]
  %v598 = vld [vmem:[%s595 + $0x8] sm:$0xf]
  %v599 = vld [vmem:[%s595 + $0xc] sm:$0xf]
  %v600 = vld [vmem:[%s595 + $0x10] sm:$0xf]
  %v601 = vld [vmem:[%s595 + $0x14] sm:$0xf]
  %v602 = vld [vmem:[%s595 + $0x18] sm:$0xf]
  %v603 = vld [vmem:[%s595 + $0x1c] sm:$0xf]
  %v604 = vpack.c.bf16 %v589, %v588
  %v605 = vperm.slane %v18, 4
  %v610 = vunpack.c.l.b16 %v591
  %v611 = vunpack.c.l.b16 %v592
  %v612 = vunpack.c.l.b16 %v593
  %v613 = vunpack.c.l.b16 %v594
  %v614 = vpack.c.b16 %v611, %v610
  %v615 = vpack.c.b16 %v613, %v612
  %v619 = vsel %vm22, %v604, 0
  %621 = vmatpush.bf16.msra.mxu0 0
  %622 = vmatpush.bf16.msra.mxu0 0
  %623 = vmatpush.bf16.msra.mxu0 0
  %624 = vmatpush.bf16.msra.mxu0 0
  %625 = vmatpush.bf16.msra.mxu0 0
  %626 = vmatpush.bf16.msra.mxu0 0
  %627 = vmatpush.bf16.msra.mxu0 %v615
  %628 = vmatpush.bf16.msra.mxu0 %v614
  %629 = vmatmul.bf16.gmra.mxu0 %v619
  %v630 = vpop.f32.mrf.mxu0
  %v631 = vadd.f32 %v605, %v630
  %v632 = vpop.f32.mrf.mxu0
  %v633 = vadd.f32 %v605, %v632
  %634 = vdwg.mxu0
  %v635 = vpack.c.bf16 %v631, %v631
  %v636 = vpack.c.bf16 %v633, %v633
  %v638 = vunpack.c.l.b16 %v635
  %v639 = vpack.c.b16 %v638, %v638
  %640 = vrot.lane.b32.xlu0 %v639, 96
  %v641 = vpop.permute.xlu0 %640
  %v643 = vsel %vm139, %v635, 0
  %v646 = vsel %vm139, %v641, 0
  %648 = vmatpush.bf16.xpose.msra.mxu0 0
  %649 = vmatpush.bf16.xpose.msra.mxu0 0
  %650 = vmatpush.bf16.xpose.msra.mxu0 0
  %651 = vmatpush.bf16.xpose.msra.mxu0 0
  %652 = vmatpush.bf16.xpose.msra.mxu0 0
  %653 = vmatpush.bf16.xpose.msra.mxu0 0
  %654 = vmatpush.bf16.xpose.msra.mxu0 0
  %655 = vmatpush.bf16.xpose.msra.mxu0 %v646
  %656 = vmatmul.bf16.gmra.mxu0 %v643
  %v657 = vpop.f32.mrf.mxu0
  %v658 = vadd.f32 %v130, %v657
  %v659 = vpop.f32.mrf.mxu0
  %660 = vdwg.mxu0
  %v662 = vunpack.c.l.b16 %v636
  %v663 = vpack.c.b16 %v662, %v662
  %664 = vrot.lane.b32.xlu0 %v663, 96
  %v665 = vpop.permute.xlu0 %664
  %v667 = vsel %vm139, %v636, 0
  %v670 = vsel %vm139, %v665, 0
  %672 = vmatpush.bf16.xpose.msra.mxu0 0
  %673 = vmatpush.bf16.xpose.msra.mxu0 0
  %674 = vmatpush.bf16.xpose.msra.mxu0 0
  %675 = vmatpush.bf16.xpose.msra.mxu0 0
  %676 = vmatpush.bf16.xpose.msra.mxu0 0
  %677 = vmatpush.bf16.xpose.msra.mxu0 0
  %678 = vmatpush.bf16.xpose.msra.mxu0 0
  %679 = vmatpush.bf16.xpose.msra.mxu0 %v670
  %680 = vmatmul.bf16.gmra.mxu0 %v667
  %v681 = vpop.f32.mrf.mxu0
  %v682 = vadd.f32 %v131, %v681
  %v683 = vpop.f32.mrf.mxu0
  %684 = vdwg.mxu0
  %v685 = vmul.f32 %v658, 1.442695
  %v686 = vpow.pop %v685
  %v687 = vmul.f32 %v682, 1.442695
  %v688 = vpow.pop %v687
  %v689 = vsel %vm187, %v686, 0.0
  %690 = vadd.xlane.f32.xlu0 %v689
  %v691 = vpop.xlane.xlu0 %690
  %v692 = vsel %vm187, %v688, 0.0
  %693 = vadd.xlane.f32.xlu0 %v692
  %v694 = vpop.xlane.xlu0 %693
  %v695 = vrcp.pop %v691
  %v696 = vrcp.pop %v694
  %v697 = vmul.f32 %v686, %v695
  %v698 = vmul.f32 %v688, %v696
  %v699 = vpack.c.bf16 %v697, %v697
  %v700 = vpack.c.bf16 %v698, %v698
  %701 = vrot.lane.b32.xlu0 %v639, 64
  %v702 = vpop.permute.xlu0 %701
  %v704 = vsel %vm187, %v699, 0
  %v707 = vsel %vm205, %v702, 0
  %709 = vmatpush.bf16.msra.mxu0 0
  %710 = vmatpush.bf16.msra.mxu0 0
  %711 = vmatpush.bf16.msra.mxu0 0
  %712 = vmatpush.bf16.msra.mxu0 0
  %713 = vmatpush.bf16.msra.mxu0 0
  %714 = vmatpush.bf16.msra.mxu0 0
  %715 = vmatpush.bf16.msra.mxu0 0
  %716 = vmatpush.bf16.msra.mxu0 %v707
  %717 = vmatmul.bf16.gmra.mxu0 %v704
  %v718 = vpop.f32.mrf.mxu0
  %v719 = vadd.f32 0.0, %v718
  %v720 = vpop.f32.mrf.mxu0
  %721 = vdwg.mxu0
  %722 = vrot.lane.b32.xlu0 %v663, 64
  %v723 = vpop.permute.xlu0 %722
  %v725 = vsel %vm187, %v700, 0
  %v728 = vsel %vm205, %v723, 0
  %730 = vmatpush.bf16.msra.mxu0 0
  %731 = vmatpush.bf16.msra.mxu0 0
  %732 = vmatpush.bf16.msra.mxu0 0
  %733 = vmatpush.bf16.msra.mxu0 0
  %734 = vmatpush.bf16.msra.mxu0 0
  %735 = vmatpush.bf16.msra.mxu0 0
  %736 = vmatpush.bf16.msra.mxu0 0
  %737 = vmatpush.bf16.msra.mxu0 %v728
  %738 = vmatmul.bf16.gmra.mxu0 %v725
  %v739 = vpop.f32.mrf.mxu0
  %v740 = vadd.f32 0.0, %v739
  %v741 = vpop.f32.mrf.mxu0
  %742 = vdwg.mxu0
  %743 = vrot.lane.b32.xlu0 %v639, 112
  %v744 = vpop.permute.xlu0 %743
  %745 = vrot.lane.b32.xlu0 %v639, 80
  %v746 = vpop.permute.xlu0 %745
  %v748 = vsel %vm139, %v744, 0
  %v751 = vsel %vm139, %v746, 0
  %753 = vmatpush.bf16.xpose.msra.mxu0 0
  %754 = vmatpush.bf16.xpose.msra.mxu0 0
  %755 = vmatpush.bf16.xpose.msra.mxu0 0
  %756 = vmatpush.bf16.xpose.msra.mxu0 0
  %757 = vmatpush.bf16.xpose.msra.mxu0 0
  %758 = vmatpush.bf16.xpose.msra.mxu0 0
  %759 = vmatpush.bf16.xpose.msra.mxu0 0
  %760 = vmatpush.bf16.xpose.msra.mxu0 %v751
  %761 = vmatmul.bf16.gmra.mxu0 %v748
  %v762 = vpop.f32.mrf.mxu0
  %v763 = vadd.f32 %v130, %v762
  %v764 = vpop.f32.mrf.mxu0
  %765 = vdwg.mxu0
  %766 = vrot.lane.b32.xlu0 %v663, 112
  %v767 = vpop.permute.xlu0 %766
  %768 = vrot.lane.b32.xlu0 %v663, 80
  %v769 = vpop.permute.xlu0 %768
  %v771 = vsel %vm139, %v767, 0
  %v774 = vsel %vm139, %v769, 0
  %776 = vmatpush.bf16.xpose.msra.mxu0 0
  %777 = vmatpush.bf16.xpose.msra.mxu0 0
  %778 = vmatpush.bf16.xpose.msra.mxu0 0
  %779 = vmatpush.bf16.xpose.msra.mxu0 0
  %780 = vmatpush.bf16.xpose.msra.mxu0 0
  %781 = vmatpush.bf16.xpose.msra.mxu0 0
  %782 = vmatpush.bf16.xpose.msra.mxu0 0
  %783 = vmatpush.bf16.xpose.msra.mxu0 %v774
  %784 = vmatmul.bf16.gmra.mxu0 %v771
  %v785 = vpop.f32.mrf.mxu0
  %v786 = vadd.f32 %v131, %v785
  %v787 = vpop.f32.mrf.mxu0
  %788 = vdwg.mxu0
  %v789 = vmul.f32 %v763, 1.442695
  %v790 = vpow.pop %v789
  %v791 = vmul.f32 %v786, 1.442695
  %v792 = vpow.pop %v791
  %v793 = vsel %vm187, %v790, 0.0
  %794 = vadd.xlane.f32.xlu0 %v793
  %v795 = vpop.xlane.xlu0 %794
  %v796 = vsel %vm187, %v792, 0.0
  %797 = vadd.xlane.f32.xlu0 %v796
  %v798 = vpop.xlane.xlu0 %797
  %v799 = vrcp.pop %v795
  %v800 = vrcp.pop %v798
  %v801 = vmul.f32 %v790, %v799
  %v802 = vmul.f32 %v792, %v800
  %v803 = vpack.c.bf16 %v801, %v801
  %v804 = vpack.c.bf16 %v802, %v802
  %805 = vrot.lane.b32.xlu0 %v639, 48
  %v806 = vpop.permute.xlu0 %805
  %v808 = vsel %vm187, %v803, 0
  %v811 = vsel %vm205, %v806, 0
  %813 = vmatpush.bf16.msra.mxu0 0
  %814 = vmatpush.bf16.msra.mxu0 0
  %815 = vmatpush.bf16.msra.mxu0 0
  %816 = vmatpush.bf16.msra.mxu0 0
  %817 = vmatpush.bf16.msra.mxu0 0
  %818 = vmatpush.bf16.msra.mxu0 0
  %819 = vmatpush.bf16.msra.mxu0 0
  %820 = vmatpush.bf16.msra.mxu0 %v811
  %821 = vmatmul.bf16.gmra.mxu0 %v808
  %v822 = vpop.f32.mrf.mxu0
  %v823 = vadd.f32 0.0, %v822
  %v824 = vpop.f32.mrf.mxu0
  %825 = vdwg.mxu0
  %826 = vrot.lane.b32.xlu0 %v663, 48
  %v827 = vpop.permute.xlu0 %826
  %v829 = vsel %vm187, %v804, 0
  %v832 = vsel %vm205, %v827, 0
  %834 = vmatpush.bf16.msra.mxu0 0
  %835 = vmatpush.bf16.msra.mxu0 0
  %836 = vmatpush.bf16.msra.mxu0 0
  %837 = vmatpush.bf16.msra.mxu0 0
  %838 = vmatpush.bf16.msra.mxu0 0
  %839 = vmatpush.bf16.msra.mxu0 0
  %840 = vmatpush.bf16.msra.mxu0 0
  %841 = vmatpush.bf16.msra.mxu0 %v832
  %842 = vmatmul.bf16.gmra.mxu0 %v829
  %v843 = vpop.f32.mrf.mxu0
  %v844 = vadd.f32 0.0, %v843
  %v845 = vpop.f32.mrf.mxu0
  %846 = vdwg.mxu0
  %849 = vrot.lane.b32.xlu0 %v823, 16
  %v850 = vpop.permute.xlu0 %849
  %851 = vrot.lane.b32.xlu0 %v844, 16
  %v852 = vpop.permute.xlu0 %851
  %v855 = vsel %vm139, %v719, %v850
  %v856 = vsel %vm139, %v740, %v852
  %v857 = vpack.c.bf16 %v856, %v855
  %858 = vrot.lane.b32.xlu0 %v614, 32
  %v859 = vpop.permute.xlu0 %858
  %860 = vrot.lane.b32.xlu0 %v615, 32
  %v861 = vpop.permute.xlu0 %860
  %865 = vrot.lane.b32.xlu0 %v605, 32
  %v866 = vpop.permute.xlu0 %865
  %v869 = vsel %vm22, %v857, 0
  %871 = vmatpush.bf16.msra.mxu0 0
  %872 = vmatpush.bf16.msra.mxu0 0
  %873 = vmatpush.bf16.msra.mxu0 0
  %874 = vmatpush.bf16.msra.mxu0 0
  %875 = vmatpush.bf16.msra.mxu0 0
  %876 = vmatpush.bf16.msra.mxu0 0
  %877 = vmatpush.bf16.msra.mxu0 %v861
  %878 = vmatpush.bf16.msra.mxu0 %v859
  %879 = vmatmul.bf16.gmra.mxu0 %v869
  %v880 = vpop.f32.mrf.mxu0
  %v881 = vadd.f32 %v866, %v880
  %v882 = vpop.f32.mrf.mxu0
  %v883 = vadd.f32 %v866, %v882
  %884 = vdwg.mxu0
  %v885 = vadd.f32 %v588, %v881
  %v886 = vadd.f32 %v589, %v883
  %v887 = vsel %vm22, %v885, 0.0
  %888 = vadd.xlane.f32.xlu0 %v887
  %v889 = vpop.xlane.xlu0 %888
  %v890 = vsel %vm22, %v886, 0.0
  %891 = vadd.xlane.f32.xlu0 %v890
  %v892 = vpop.xlane.xlu0 %891
  %v893 = vmul.f32 %v889, %v35
  %v894 = vmul.f32 %v892, %v35
  %v895 = vsub.f32 %v885, %v893
  %v896 = vsub.f32 %v886, %v894
  %v897 = vmul.f32 %v895, %v895
  %v898 = vmul.f32 %v896, %v896
  %v899 = vsel %vm22, %v897, 0.0
  %900 = vadd.xlane.f32.xlu0 %v899
  %v901 = vpop.xlane.xlu0 %900
  %v902 = vsel %vm22, %v898, 0.0
  %903 = vadd.xlane.f32.xlu0 %v902
  %v904 = vpop.xlane.xlu0 %903
  %v905 = vmul.f32 %v901, %v35
  %v906 = vmul.f32 %v904, %v35
  %v907 = vadd.f32 %v905, 1e-12
  %v908 = vadd.f32 %v906, 1e-12
  %v909 = vrsqrt.pop %v907
  %v910 = vmul.f32 %v909, %v907
  %v911 = vmul.f32 %v910, %v909
  %v912 = vmul.f32 0.5, %v911
  %v913 = vsub.f32 1.5, %v912
  %v914 = vmul.f32 %v909, %v913
  %vm915 = vweird.f32 %v907
  %vm916 = vweird.f32 %v909
  %vm917 = vmor %vm915, %vm916
  %v918 = vsel %vm917, %v909, %v914
  %v919 = vrsqrt.pop %v908
  %v920 = vmul.f32 %v919, %v908
  %v921 = vmul.f32 %v920, %v919
  %v922 = vmul.f32 0.5, %v921
  %v923 = vsub.f32 1.5, %v922
  %v924 = vmul.f32 %v919, %v923
  %vm925 = vweird.f32 %v908
  %vm926 = vweird.f32 %v919
  %vm927 = vmor %vm925, %vm926
  %v928 = vsel %vm927, %v919, %v924
  %v929 = vmul.f32 %v895, %v918
  %v930 = vmul.f32 %v896, %v928
  %v931 = vperm.slane %v18, 5
  %v932 = vmul.f32 %v929, %v931
  %v933 = vmul.f32 %v930, %v931
  %935 = vrot.lane.b32.xlu0 %v931, 96
  %v936 = vpop.permute.xlu0 %935
  %v938 = vadd.f32 %v932, %v936
  %v939 = vadd.f32 %v933, %v936
  %v940 = vpack.c.bf16 %v939, %v938
  %v945 = vunpack.c.l.b16 %v596
  %v946 = vunpack.c.l.b16 %v597
  %v947 = vunpack.c.l.b16 %v598
  %v948 = vunpack.c.l.b16 %v599
  %v949 = vpack.c.b16 %v946, %v945
  %v950 = vpack.c.b16 %v948, %v947
  %953 = vrot.lane.b32.xlu0 %v931, 64
  %v954 = vpop.permute.xlu0 %953
  %v957 = vsel %vm22, %v940, 0
  %959 = vmatpush.bf16.msra.mxu0 0
  %960 = vmatpush.bf16.msra.mxu0 0
  %961 = vmatpush.bf16.msra.mxu0 0
  %962 = vmatpush.bf16.msra.mxu0 0
  %963 = vmatpush.bf16.msra.mxu0 0
  %964 = vmatpush.bf16.msra.mxu0 0
  %965 = vmatpush.bf16.msra.mxu0 %v950
  %966 = vmatpush.bf16.msra.mxu0 %v949
  %967 = vmatmul.bf16.gmra.mxu0 %v957
  %v968 = vpop.f32.mrf.mxu0
  %v969 = vadd.f32 %v954, %v968
  %v970 = vpop.f32.mrf.mxu0
  %v971 = vadd.f32 %v954, %v970
  %972 = vdwg.mxu0
  %v973 = vmul.f32 %v969, %v969
  %v974 = vmul.f32 %v971, %v971
  %v975 = vmul.f32 %v969, %v973
  %v976 = vmul.f32 %v971, %v974
  %v977 = vmul.f32 %v975, 0.044715
  %v978 = vmul.f32 %v976, 0.044715
  %v979 = vadd.f32 %v969, %v977
  %v980 = vadd.f32 %v971, %v978
  %v981 = vmul.f32 %v979, 0.7978846
  %v982 = vmul.f32 %v980, 0.7978846
  %v983 = vtanh.pop %v981
  %v984 = vtanh.pop %v982
  %v985 = vadd.f32 %v983, 1.0
  %v986 = vadd.f32 %v984, 1.0
  %v987 = vmul.f32 %v985, 0.5
  %v988 = vmul.f32 %v986, 0.5
  %v989 = vmul.f32 %v969, %v987
  %v990 = vmul.f32 %v971, %v988
  %v991 = vpack.c.bf16 %v990, %v989
  %v992 = vperm.slane %v18, 6
  %v997 = vunpack.c.l.b16 %v600
  %v998 = vunpack.c.l.b16 %v601
  %v999 = vunpack.c.l.b16 %v602
  %v1000 = vunpack.c.l.b16 %v603
  %v1001 = vpack.c.b16 %v998, %v997
  %v1002 = vpack.c.b16 %v1000, %v999
  %1003 = vrot.lane.b32.xlu0 %v949, 64
  %v1004 = vpop.permute.xlu0 %1003
  %1005 = vrot.lane.b32.xlu0 %v950, 64
  %v1006 = vpop.permute.xlu0 %1005
  %1007 = vrot.lane.b32.xlu0 %v1001, 64
  %v1008 = vpop.permute.xlu0 %1007
  %1009 = vrot.lane.b32.xlu0 %v1002, 64
  %v1010 = vpop.permute.xlu0 %1009
  %v1016 = vsel %vm515, %v991, 0
  %1018 = vmatpush.bf16.msra.mxu0 0
  %1019 = vmatpush.bf16.msra.mxu0 0
  %1020 = vmatpush.bf16.msra.mxu0 0
  %1021 = vmatpush.bf16.msra.mxu0 0
  %1022 = vmatpush.bf16.msra.mxu0 %v1010
  %1023 = vmatpush.bf16.msra.mxu0 %v1008
  %1024 = vmatpush.bf16.msra.mxu0 %v1006
  %1025 = vmatpush.bf16.msra.mxu0 %v1004
  %1026 = vmatmul.bf16.gmra.mxu0 %v1016
  %v1027 = vpop.f32.mrf.mxu0
  %v1028 = vadd.f32 %v992, %v1027
  %v1029 = vpop.f32.mrf.mxu0
  %v1030 = vadd.f32 %v992, %v1029
  %1031 = vdwg.mxu0
  %v1032 = vadd.f32 %v938, %v1028
  %v1033 = vadd.f32 %v939, %v1030
  %v1034 = vsel %vm22, %v1032, 0.0
  %1035 = vadd.xlane.f32.xlu0 %v1034
  %v1036 = vpop.xlane.xlu0 %1035
  %v1037 = vsel %vm22, %v1033, 0.0
  %1038 = vadd.xlane.f32.xlu0 %v1037
  %v1039 = vpop.xlane.xlu0 %1038
  %v1040 = vmul.f32 %v1036, %v35
  %v1041 = vmul.f32 %v1039, %v35
  %v1042 = vsub.f32 %v1032, %v1040
  %v1043 = vsub.f32 %v1033, %v1041
  %v1044 = vmul.f32 %v1042, %v1042
  %v1045 = vmul.f32 %v1043, %v1043
  %v1046 = vsel %vm22, %v1044, 0.0
  %1047 = vadd.xlane.f32.xlu0 %v1046
  %v1048 = vpop.xlane.xlu0 %1047
  %v1049 = vsel %vm22, %v1045, 0.0
  %1050 = vadd.xlane.f32.xlu0 %v1049
  %v1051 = vpop.xlane.xlu0 %1050
  %v1052 = vmul.f32 %v1048, %v35
  %v1053 = vmul.f32 %v1051, %v35
  %v1054 = vadd.f32 %v1052, 1e-12
  %v1055 = vadd.f32 %v1053, 1e-12
  %v1056 = vrsqrt.pop %v1054
  %v1057 = vmul.f32 %v1056, %v1054
  %v1058 = vmul.f32 %v1057, %v1056
  %v1059 = vmul.f32 0.5, %v1058
  %v1060 = vsub.f32 1.5, %v1059
  %v1061 = vmul.f32 %v1056, %v1060
  %vm1062 = vweird.f32 %v1054
  %vm1063 = vweird.f32 %v1056
  %vm1064 = vmor %vm1062, %vm1063
  %v1065 = vsel %vm1064, %v1056, %v1061
  %v1066 = vrsqrt.pop %v1055
  %v1067 = vmul.f32 %v1066, %v1055
  %v1068 = vmul.f32 %v1067, %v1066
  %v1069 = vmul.f32 0.5, %v1068
  %v1070 = vsub.f32 1.5, %v1069
  %v1071 = vmul.f32 %v1066, %v1070
  %vm1072 = vweird.f32 %v1055
  %vm1073 = vweird.f32 %v1066
  %vm1074 = vmor %vm1072, %vm1073
  %v1075 = vsel %vm1074, %v1066, %v1071
  %v1076 = vmul.f32 %v1042, %v1065
  %v1077 = vmul.f32 %v1043, %v1075
  %1079 = vrot.lane.b32.xlu0 %v992, 96
  %v1080 = vpop.permute.xlu0 %1079
  %v1082 = vmul.f32 %v1076, %v1080
  %v1083 = vmul.f32 %v1077, %v1080
  %1084 = vrot.lane.b32.xlu0 %v992, 64
  %v1085 = vpop.permute.xlu0 %1084
  %v1087 = vadd.f32 %v1082, %v1085
  %v1088 = vadd.f32 %v1083, %v1085
  %v1089 = vld [vmem:[%s595] sm:$0xf]
  %v1090 = vld [vmem:[%s595 + $0x4] sm:$0xf]
  %v1091 = vld [vmem:[%s595 + $0x8] sm:$0xf]
  %v1092 = vld [vmem:[%s595 + $0xc] sm:$0xf]
  %v1093 = vld [vmem:[%s595 + $0x10] sm:$0xf]
  %v1094 = vld [vmem:[%s595 + $0x14] sm:$0xf]
  %v1095 = vld [vmem:[%s595 + $0x18] sm:$0xf]
  %v1096 = vld [vmem:[%s595 + $0x1c] sm:$0xf]
  %v1097 = vpack.c.bf16 %v1087, %v1087
  %v1098 = vpack.c.bf16 %v1088, %v1088
  %v1099 = vperm.slane %v18, 7
  %v1102 = vunpack.c.l.b16 %v1097
  %v1103 = vunpack.c.l.b16 %v1098
  %v1104 = vrot.slane %v1103, 7
  %vm1105 = vcmask 1041409
  %v1106 = vsel %vm1105, %v1104, %v1102
  %v1107 = vpack.c.b16 %v1106, %v1106
  %v1112 = vunpack.c.l.b16 %v1089
  %v1113 = vunpack.c.l.b16 %v1090
  %v1114 = vunpack.c.l.b16 %v1091
  %v1115 = vunpack.c.l.b16 %v1092
  %v1116 = vpack.c.b16 %v1113, %v1112
  %v1117 = vpack.c.b16 %v1115, %v1114
  %1118 = vrot.lane.b32.xlu0 %v1116, 32
  %v1119 = vpop.permute.xlu0 %1118
  %1120 = vrot.lane.b32.xlu0 %v1117, 32
  %v1121 = vpop.permute.xlu0 %1120
  %v1125 = vsel %vm22, %v1107, 0
  %1127 = vmatpush.bf16.msra.mxu0 0
  %1128 = vmatpush.bf16.msra.mxu0 0
  %1129 = vmatpush.bf16.msra.mxu0 0
  %1130 = vmatpush.bf16.msra.mxu0 0
  %1131 = vmatpush.bf16.msra.mxu0 0
  %1132 = vmatpush.bf16.msra.mxu0 0
  %1133 = vmatpush.bf16.msra.mxu0 %v1121
  %1134 = vmatpush.bf16.msra.mxu0 %v1119
  %1135 = vmatmul.bf16.gmra.mxu0 %v1125
  %v1136 = vpop.f32.mrf.mxu0
  %v1137 = vadd.f32 %v1099, %v1136
  %v1138 = vpop.f32.mrf.mxu0
  %1139 = vdwg.mxu0
  %v1140 = vtanh.pop %v1137
  %v1141 = vpack.c.bf16 %v1140, %v1140
  %v1146 = vunpack.c.l.b16 %v1093
  %v1147 = vunpack.c.l.b16 %v1094
  %v1148 = vunpack.c.l.b16 %v1095
  %v1149 = vunpack.c.l.b16 %v1096
  %v1150 = vpack.c.b16 %v1147, %v1146
  %v1151 = vpack.c.b16 %v1149, %v1148
  %1152 = vrot.lane.b32.xlu0 %v1150, 32
  %v1153 = vpop.permute.xlu0 %1152
  %1154 = vrot.lane.b32.xlu0 %v1151, 32
  %v1155 = vpop.permute.xlu0 %1154
  %1159 = vrot.lane.b32.xlu0 %v1099, 96
  %v1160 = vpop.permute.xlu0 %1159
  %v1163 = vsel %vm22, %v1141, 0
  %1165 = vmatpush.bf16.msra.mxu0 0
  %1166 = vmatpush.bf16.msra.mxu0 0
  %1167 = vmatpush.bf16.msra.mxu0 0
  %1168 = vmatpush.bf16.msra.mxu0 0
  %1169 = vmatpush.bf16.msra.mxu0 0
  %1170 = vmatpush.bf16.msra.mxu0 0
  %1171 = vmatpush.bf16.msra.mxu0 %v1155
  %1172 = vmatpush.bf16.msra.mxu0 %v1153
  %1173 = vmatmul.bf16.gmra.mxu0 %v1163
  %v1174 = vpop.f32.mrf.mxu0
  %v1175 = vadd.f32 %v1160, %v1174
  %v1176 = vpop.f32.mrf.mxu0
  %1177 = vdwg.mxu0
  %v1180 = vrot.slane %v1088, 7
  %v1181 = vsel %vm1105, %v1180, %v1087
  %1182 = vrot.lane.b32.xlu0 %v1181, 32
  %v1183 = vpop.permute.xlu0 %1182
  %1186 = vrot.lane.b32.xlu0 %v1140, 64
  %v1187 = vpop.permute.xlu0 %1186
  %v1189 = vsel %vm22, %v1175, %v1183
  %v1190 = vsel %vm515, %v1189, %v1187
  %vm1191 = vcmask 785408
  %v1192 = vsel %vm1191, %v1190, 0.0
  %1193 = vst [vmem:[%s4] sm:$0x3] %v1192
  // Predicated region
  $region18: #{text_bert_forward.1} parent=0 // pred_check
    _
  $region19: #{text_bert_forward.1} parent=0 // pred_check_branch
    %1195 = sbr.rel (0) target = $region21
  $region20: #{text_bert_forward.1} parent=0 // pred_region
    _
  $region21: #{text_bert_forward.1} parent=0 // pred_fallthru
    _
  // Predicated region
  $region22: #{text_bert_forward.1} parent=0 // pred_check
    _
  $region23: #{text_bert_forward.1} parent=0 // pred_check_branch
    %1197 = sbr.rel (0) target = $region25
  $region24: #{text_bert_forward.1} parent=0 // pred_region
    _
  $region25: #{text_bert_forward.1} parent=0 // pred_fallthru
    _

</llo_original>
